<compile_context>
chip_gen: v7x
topology: tpu7x:2x2x1
jax: 0.10.0
libtpu: 0.0.40
codegen_flags: <defaults>
</compile_context>

<pallas_src>
import functools

import jax
import jax.numpy as jnp
from jax import lax
from jax.experimental import pallas as pl
from jax.experimental.pallas import tpu as pltpu


# ----------------------------- Pallas kernel --------------------------------

def dual_rnn_kernel(x_ref,        # (T*B, I)  f32, time-major, flattened
                    wih0_ref,     # (I, 4H)   f32
                    b0_ref,       # (1, 4H)   f32, b_ih0 + b_hh0
                    whh0_ref,     # (H, 4H)   bf16
                    wih1_ref,     # (H, 4H)   bf16
                    whh1_ref,     # (H, 4H)   bf16
                    b1_ref,       # (1, 4H)   f32, b_ih1 + b_hh1
                    wheads_ref,   # (H, 2O)   f32, BN folded in, both heads
                    bheads_ref,   # (1, 2O)   f32
                    out_ref,      # (B, 2O)   f32
                    *, hidden_size, seq_len, batch):
    H = hidden_size
    T = seq_len
    B = batch
    bf16 = jnp.bfloat16

    # Hoisted layer-0 input projection: one well-filled matmul, bias folded in.
    xproj = (jnp.dot(x_ref[...], wih0_ref[...],
                     preferred_element_type=jnp.float32)
             + b0_ref[...])                                    # (T*B, 4H) f32

    whh0 = whh0_ref[...]
    wih1 = wih1_ref[...]
    whh1 = whh1_ref[...]
    # Hoisted: JAX does not CSE broadcast_in_dim; do it once, not T times.
    b1b = jnp.broadcast_to(b1_ref[...], (B, 4 * H))            # (B, 4H) f32

    def lstm_cell(gates, c):
        # Full-width activations over the (B, 4H) = (8, 128) gate vreg:
        # one EUP push for the tanh-form sigmoid, one for tanh, no
        # sub-128-lane pre-slices.  Gate order is PyTorch's (i, f, g, o).
        sg = 0.5 * jnp.tanh(0.5 * gates) + 0.5                 # sigmoid(gates)
        tg = jnp.tanh(gates)
        i = sg[:, 0:H]
        f = sg[:, H:2 * H]
        g = tg[:, 2 * H:3 * H]
        o = sg[:, 3 * H:4 * H]
        c_new = f * c + i * g
        return o * jnp.tanh(c_new), c_new

    z = jnp.zeros((B, H), jnp.float32)
    h0, c0, h1, c1 = z, z, z, z

    # Fully unrolled time loop (T small and static): static aligned slices,
    # full LLO scheduler visibility across timesteps.  vreg pressure is
    # trivial at these sizes (no spill risk).
    for t in range(T):
        # Off-critical-path part of layer-1 gates: depends only on the
        # previous step's h1, so it can issue in parallel with layer-0's
        # recurrent matmul and activations below.
        g1_off = (jnp.dot(h1.astype(bf16), whh1,
                          preferred_element_type=jnp.float32) + b1b)

        # ---- layer 0 (serial chain): recurrent matmul only ----
        g0 = (xproj[t * B:(t + 1) * B, :]
              + jnp.dot(h0.astype(bf16), whh0,
                        preferred_element_type=jnp.float32))
        h0, c0 = lstm_cell(g0, c0)
        # inter-layer dropout: eval-mode no-op

        # ---- layer 1: only h0_new @ w_ih1 remains on the serial chain ----
        g1 = g1_off + jnp.dot(h0.astype(bf16), wih1,
                              preferred_element_type=jnp.float32)
        h1, c1 = lstm_cell(g1, c1)

    # Fused heads (eval-mode BatchNorm already folded into W/b).  Single tiny
    # store; lane-density is irrelevant at (B, 2O) = (8, 8).
    out_ref[...] = (jnp.dot(h1, wheads_ref[...],
                            preferred_element_type=jnp.float32)
                    + bheads_ref[...])


# ------------------------------- Wrapper -------------------------------------

def dual_output_rnn_forward(x, params, *, hidden_size, eps=1e-5):
    """x: (B, T, I) float32  ->  (out1, out2), each (B, output_size)."""
    B, T, I = x.shape
    H = hidden_size
    O = params["w_head1"].shape[1]

    # Pad batch to a full 8-row sublane tile: per-step xproj slices become
    # aligned full vregs and the state arrays fill all 8 sublanes.  The pad
    # rows carry zeros and are sliced off at the end.
    Bp = max(8, ((B + 7) // 8) * 8)
    if Bp != B:
        x = jnp.pad(x, ((0, Bp - B), (0, 0), (0, 0)))

    # ---- weight prep (one-time, trace-level constant folding) ----
    wih0 = params["w_ih0"]                       # (I, 4H) f32 (one-off matmul)
    b0 = params["b0"]                            # (1, 4H)
    whh0 = params["w_hh0"].astype(jnp.bfloat16)  # recurrent weights -> bf16
    wih1 = params["w_ih1"].astype(jnp.bfloat16)
    whh1 = params["w_hh1"].astype(jnp.bfloat16)
    b1 = params["b1"]                            # (1, 4H)

    # Fold eval-mode BatchNorm1d into the head weights / biases.
    scale = params["bn_gamma"] * lax.rsqrt(params["bn_var"] + eps)   # (1, H)
    shift = params["bn_beta"] - params["bn_mean"] * scale            # (1, H)

    def fold_head(w, b):
        return w * scale.reshape(H, 1), b + shift @ w

    w1, bb1 = fold_head(params["w_head1"], params["b_head1"])
    w2, bb2 = fold_head(params["w_head2"], params["b_head2"])
    w_heads = jnp.concatenate([w1, w2], axis=1)                # (H, 2O)
    b_heads = jnp.concatenate([bb1, bb2], axis=1)              # (1, 2O)

    # Time-major + flattened so the layer-0 input projection is one matmul.
    x_flat = jnp.transpose(x, (1, 0, 2)).reshape(T * Bp, I)

    kernel = functools.partial(dual_rnn_kernel,
                               hidden_size=H, seq_len=T, batch=Bp)
    vmem = pl.BlockSpec(memory_space=pltpu.MemorySpace.VMEM)
    args = (x_flat, wih0, b0, whh0, wih1, whh1, b1, w_heads, b_heads)

    out = pl.pallas_call(
        kernel,
        out_shape=jax.ShapeDtypeStruct((Bp, 2 * O), jnp.float32),
        in_specs=[vmem] * len(args),
        out_specs=vmem,
    )(*args)

    return out[:B, :O], out[:B, O:]


# --------------------------- Pure-JAX reference -------------------------------

def reference_forward(x, params, *, hidden_size, eps=1e-5):
    B, T, I = x.shape
    H = hidden_size

    def cell(xt, h, c, w_ih, w_hh, b):
        gates = xt @ w_ih + h @ w_hh + b
        i = jax.nn.sigmoid(gates[:, 0 * H:1 * H])
        f = jax.nn.sigmoid(gates[:, 1 * H:2 * H])
        g = jnp.tanh(gates[:, 2 * H:3 * H])
        o = jax.nn.sigmoid(gates[:, 3 * H:4 * H])
        c = f * c + i * g
        return o * jnp.tanh(c), c

    def scan_step(carry, xt):
        h0, c0, h1, c1 = carry
        h0, c0 = cell(xt, h0, c0, params["w_ih0"], params["w_hh0"], params["b0"])
        h1, c1 = cell(h0, h1, c1, params["w_ih1"], params["w_hh1"], params["b1"])
        return (h0, c0, h1, c1), None

    z = jnp.zeros((B, H), jnp.float32)
    (_, _, h1, _), _ = lax.scan(scan_step, (z, z, z, z),
                                jnp.transpose(x, (1, 0, 2)))
    feat = ((h1 - params["bn_mean"]) * lax.rsqrt(params["bn_var"] + eps)
            * params["bn_gamma"] + params["bn_beta"])
    return (feat @ params["w_head1"] + params["b_head1"],
            feat @ params["w_head2"] + params["b_head2"])


# ------------------------------- Params ---------------------------------------

def init_params(key, input_size, hidden_size, output_size):
    """Deterministic synthetic params (PyTorch-style uniform(-k, k), k=1/sqrt(H))."""
    H = hidden_size
    k = 1.0 / jnp.sqrt(jnp.float32(H))
    keys = jax.random.split(key, 12)

    def u(kk, shape):
        return jax.random.uniform(kk, shape, jnp.float32, -k, k)

    return {
        # layer 0 (input_size -> H), stored transposed: (in, 4H),
        # gate order (i, f, g, o) like PyTorch.
        "w_ih0": u(keys[0], (input_size, 4 * H)),
        "w_hh0": u(keys[1], (H, 4 * H)),
        "b0":    u(keys[2], (1, 4 * H)) + u(keys[3], (1, 4 * H)),  # b_ih + b_hh
        # layer 1 (H -> H)
        "w_ih1": u(keys[4], (H, 4 * H)),
        "w_hh1": u(keys[5], (H, 4 * H)),
        "b1":    u(keys[6], (1, 4 * H)) + u(keys[7], (1, 4 * H)),
        # BatchNorm1d (PyTorch defaults, eval mode)
        "bn_gamma": jnp.ones((1, H), jnp.float32),
        "bn_beta":  jnp.zeros((1, H), jnp.float32),
        "bn_mean":  jnp.zeros((1, H), jnp.float32),
        "bn_var":   jnp.ones((1, H), jnp.float32),
        # output heads (H -> output_size), transposed
        "w_head1": u(keys[8], (H, output_size)),
        "b_head1": u(keys[9], (1, output_size)),
        "w_head2": u(keys[10], (H, output_size)),
        "b_head2": u(keys[11], (1, output_size)),
    }


# --------------------------------- Main ----------------------------------------

if __name__ == "__main__":
    INPUT_SIZE = 8
    HIDDEN_SIZE = 32
    OUTPUT_SIZE = 4
    BATCH = 4
    SEQ = 8

    root = jax.random.PRNGKey(0)
    k_param, k_x = jax.random.split(root)
    params = init_params(k_param, INPUT_SIZE, HIDDEN_SIZE, OUTPUT_SIZE)
    x = jax.random.normal(k_x, (BATCH, SEQ, INPUT_SIZE), jnp.float32)

    out1, out2 = jax.block_until_ready(
        dual_output_rnn_forward(x, params, hidden_size=HIDDEN_SIZE))

    ref1, ref2 = reference_forward(x, params, hidden_size=HIDDEN_SIZE)
    assert out1.shape == (BATCH, OUTPUT_SIZE) and out2.shape == (BATCH, OUTPUT_SIZE)
    # Tolerance loosened vs the pure-f32 version: the recurrent matmuls now use
    # single-pass bf16 operands (f32 accumulate) and rounding compounds over
    # the 8-step, 2-layer recurrence.
    assert jnp.allclose(out1, ref1, atol=5e-2, rtol=5e-2)
    assert jnp.allclose(out2, ref2, atol=5e-2, rtol=5e-2)

    print("KERNEL_OK")
</pallas_src>

<mosaic_0001>
module attributes {stable_mosaic.version = 11 : i64} {
  func.func @dual_rnn_kernel(%arg0: memref<64x8xf32, #tpu.memory_space<vmem>>, %arg1: memref<8x128xf32, #tpu.memory_space<vmem>>, %arg2: memref<1x128xf32, #tpu.memory_space<vmem>>, %arg3: memref<32x128xbf16, #tpu.memory_space<vmem>>, %arg4: memref<32x128xbf16, #tpu.memory_space<vmem>>, %arg5: memref<32x128xbf16, #tpu.memory_space<vmem>>, %arg6: memref<1x128xf32, #tpu.memory_space<vmem>>, %arg7: memref<32x8xf32, #tpu.memory_space<vmem>>, %arg8: memref<1x8xf32, #tpu.memory_space<vmem>>, %arg9: memref<8x8xf32, #tpu.memory_space<vmem>>) attributes {dimension_semantics = [], scalar_prefetch = 0 : i64, scratch_operands = 0 : i64, tpu.core_type = #tpu.core_type<tc>} {
    %c0 = arith.constant 0 : index
    %c0_0 = arith.constant 0 : index
    %0 = vector.load %arg0[%c0, %c0_0] : memref<64x8xf32, #tpu.memory_space<vmem>>, vector<64x8xf32>
    %c0_1 = arith.constant 0 : index
    %c0_2 = arith.constant 0 : index
    %1 = vector.load %arg1[%c0_1, %c0_2] : memref<8x128xf32, #tpu.memory_space<vmem>>, vector<8x128xf32>
    %cst = arith.constant dense<0.000000e+00> : vector<64x128xf32>
    %2 = tpu.matmul %0, %1, %cst {dimension_numbers = #tpu.dot_dimension_numbers<[1], [0], [0], [1], [0, 0, 1, 1], [], []>} : vector<64x8xf32>, vector<8x128xf32>, vector<64x128xf32> -> vector<64x128xf32>
    %c0_3 = arith.constant 0 : index
    %c0_4 = arith.constant 0 : index
    %3 = vector.load %arg2[%c0_3, %c0_4] : memref<1x128xf32, #tpu.memory_space<vmem>>, vector<1x128xf32>
    %4 = vector.broadcast %3 : vector<1x128xf32> to vector<64x128xf32>
    %5 = arith.addf %2, %4 : vector<64x128xf32>
    %c0_5 = arith.constant 0 : index
    %c0_6 = arith.constant 0 : index
    %6 = vector.load %arg3[%c0_5, %c0_6] : memref<32x128xbf16, #tpu.memory_space<vmem>>, vector<32x128xbf16>
    %c0_7 = arith.constant 0 : index
    %c0_8 = arith.constant 0 : index
    %7 = vector.load %arg4[%c0_7, %c0_8] : memref<32x128xbf16, #tpu.memory_space<vmem>>, vector<32x128xbf16>
    %c0_9 = arith.constant 0 : index
    %c0_10 = arith.constant 0 : index
    %8 = vector.load %arg5[%c0_9, %c0_10] : memref<32x128xbf16, #tpu.memory_space<vmem>>, vector<32x128xbf16>
    %c0_11 = arith.constant 0 : index
    %c0_12 = arith.constant 0 : index
    %9 = vector.load %arg6[%c0_11, %c0_12] : memref<1x128xf32, #tpu.memory_space<vmem>>, vector<1x128xf32>
    %10 = vector.shape_cast %9 : vector<1x128xf32> to vector<1x128xf32>
    %11 = vector.broadcast %10 : vector<1x128xf32> to vector<8x128xf32>
    %cst_13 = arith.constant 0.000000e+00 : f32
    %12 = vector.broadcast %cst_13 : f32 to vector<8x32xf32>
    %13 = arith.truncf %12 : vector<8x32xf32> to vector<8x32xbf16>
    %cst_14 = arith.constant dense<0.000000e+00> : vector<8x128xf32>
    %14 = tpu.matmul %13, %8, %cst_14 {dimension_numbers = #tpu.dot_dimension_numbers<[1], [0], [0], [1], [0, 0, 1, 1], [], []>} : vector<8x32xbf16>, vector<32x128xbf16>, vector<8x128xf32> -> vector<8x128xf32>
    %15 = arith.addf %14, %11 : vector<8x128xf32>
    %16 = vector.extract_strided_slice %5 {offsets = [0, 0], sizes = [8, 128], strides = [1, 1]} : vector<64x128xf32> to vector<8x128xf32>
    %17 = arith.truncf %12 : vector<8x32xf32> to vector<8x32xbf16>
    %cst_15 = arith.constant dense<0.000000e+00> : vector<8x128xf32>
    %18 = tpu.matmul %17, %6, %cst_15 {dimension_numbers = #tpu.dot_dimension_numbers<[1], [0], [0], [1], [0, 0, 1, 1], [], []>} : vector<8x32xbf16>, vector<32x128xbf16>, vector<8x128xf32> -> vector<8x128xf32>
    %19 = arith.addf %16, %18 : vector<8x128xf32>
    %cst_16 = arith.constant 5.000000e-01 : f32
    %20 = vector.broadcast %cst_16 : f32 to vector<8x128xf32>
    %21 = arith.mulf %20, %19 : vector<8x128xf32>
    %22 = math.tanh %21 : vector<8x128xf32>
    %cst_17 = arith.constant 5.000000e-01 : f32
    %23 = vector.broadcast %cst_17 : f32 to vector<8x128xf32>
    %24 = arith.mulf %23, %22 : vector<8x128xf32>
    %cst_18 = arith.constant 5.000000e-01 : f32
    %25 = vector.broadcast %cst_18 : f32 to vector<8x128xf32>
    %26 = arith.addf %24, %25 : vector<8x128xf32>
    %27 = math.tanh %19 : vector<8x128xf32>
    %28 = vector.extract_strided_slice %26 {offsets = [0, 0], sizes = [8, 32], strides = [1, 1]} : vector<8x128xf32> to vector<8x32xf32>
    %29 = vector.extract_strided_slice %26 {offsets = [0, 32], sizes = [8, 32], strides = [1, 1]} : vector<8x128xf32> to vector<8x32xf32>
    %30 = vector.extract_strided_slice %27 {offsets = [0, 64], sizes = [8, 32], strides = [1, 1]} : vector<8x128xf32> to vector<8x32xf32>
    %31 = vector.extract_strided_slice %26 {offsets = [0, 96], sizes = [8, 32], strides = [1, 1]} : vector<8x128xf32> to vector<8x32xf32>
    %32 = arith.mulf %29, %12 : vector<8x32xf32>
    %33 = arith.mulf %28, %30 : vector<8x32xf32>
    %34 = arith.addf %32, %33 : vector<8x32xf32>
    %35 = math.tanh %34 : vector<8x32xf32>
    %36 = arith.mulf %31, %35 : vector<8x32xf32>
    %37 = arith.truncf %36 : vector<8x32xf32> to vector<8x32xbf16>
    %cst_19 = arith.constant dense<0.000000e+00> : vector<8x128xf32>
    %38 = tpu.matmul %37, %7, %cst_19 {dimension_numbers = #tpu.dot_dimension_numbers<[1], [0], [0], [1], [0, 0, 1, 1], [], []>} : vector<8x32xbf16>, vector<32x128xbf16>, vector<8x128xf32> -> vector<8x128xf32>
    %39 = arith.addf %15, %38 : vector<8x128xf32>
    %cst_20 = arith.constant 5.000000e-01 : f32
    %40 = vector.broadcast %cst_20 : f32 to vector<8x128xf32>
    %41 = arith.mulf %40, %39 : vector<8x128xf32>
    %42 = math.tanh %41 : vector<8x128xf32>
    %cst_21 = arith.constant 5.000000e-01 : f32
    %43 = vector.broadcast %cst_21 : f32 to vector<8x128xf32>
    %44 = arith.mulf %43, %42 : vector<8x128xf32>
    %cst_22 = arith.constant 5.000000e-01 : f32
    %45 = vector.broadcast %cst_22 : f32 to vector<8x128xf32>
    %46 = arith.addf %44, %45 : vector<8x128xf32>
    %47 = math.tanh %39 : vector<8x128xf32>
    %48 = vector.extract_strided_slice %46 {offsets = [0, 0], sizes = [8, 32], strides = [1, 1]} : vector<8x128xf32> to vector<8x32xf32>
    %49 = vector.extract_strided_slice %46 {offsets = [0, 32], sizes = [8, 32], strides = [1, 1]} : vector<8x128xf32> to vector<8x32xf32>
    %50 = vector.extract_strided_slice %47 {offsets = [0, 64], sizes = [8, 32], strides = [1, 1]} : vector<8x128xf32> to vector<8x32xf32>
    %51 = vector.extract_strided_slice %46 {offsets = [0, 96], sizes = [8, 32], strides = [1, 1]} : vector<8x128xf32> to vector<8x32xf32>
    %52 = arith.mulf %49, %12 : vector<8x32xf32>
    %53 = arith.mulf %48, %50 : vector<8x32xf32>
    %54 = arith.addf %52, %53 : vector<8x32xf32>
    %55 = math.tanh %54 : vector<8x32xf32>
    %56 = arith.mulf %51, %55 : vector<8x32xf32>
    %57 = arith.truncf %56 : vector<8x32xf32> to vector<8x32xbf16>
    %cst_23 = arith.constant dense<0.000000e+00> : vector<8x128xf32>
    %58 = tpu.matmul %57, %8, %cst_23 {dimension_numbers = #tpu.dot_dimension_numbers<[1], [0], [0], [1], [0, 0, 1, 1], [], []>} : vector<8x32xbf16>, vector<32x128xbf16>, vector<8x128xf32> -> vector<8x128xf32>
    %59 = arith.addf %58, %11 : vector<8x128xf32>
    %60 = vector.extract_strided_slice %5 {offsets = [8, 0], sizes = [8, 128], strides = [1, 1]} : vector<64x128xf32> to vector<8x128xf32>
    %61 = arith.truncf %36 : vector<8x32xf32> to vector<8x32xbf16>
    %cst_24 = arith.constant dense<0.000000e+00> : vector<8x128xf32>
    %62 = tpu.matmul %61, %6, %cst_24 {dimension_numbers = #tpu.dot_dimension_numbers<[1], [0], [0], [1], [0, 0, 1, 1], [], []>} : vector<8x32xbf16>, vector<32x128xbf16>, vector<8x128xf32> -> vector<8x128xf32>
    %63 = arith.addf %60, %62 : vector<8x128xf32>
    %cst_25 = arith.constant 5.000000e-01 : f32
    %64 = vector.broadcast %cst_25 : f32 to vector<8x128xf32>
    %65 = arith.mulf %64, %63 : vector<8x128xf32>
    %66 = math.tanh %65 : vector<8x128xf32>
    %cst_26 = arith.constant 5.000000e-01 : f32
    %67 = vector.broadcast %cst_26 : f32 to vector<8x128xf32>
    %68 = arith.mulf %67, %66 : vector<8x128xf32>
    %cst_27 = arith.constant 5.000000e-01 : f32
    %69 = vector.broadcast %cst_27 : f32 to vector<8x128xf32>
    %70 = arith.addf %68, %69 : vector<8x128xf32>
    %71 = math.tanh %63 : vector<8x128xf32>
    %72 = vector.extract_strided_slice %70 {offsets = [0, 0], sizes = [8, 32], strides = [1, 1]} : vector<8x128xf32> to vector<8x32xf32>
    %73 = vector.extract_strided_slice %70 {offsets = [0, 32], sizes = [8, 32], strides = [1, 1]} : vector<8x128xf32> to vector<8x32xf32>
    %74 = vector.extract_strided_slice %71 {offsets = [0, 64], sizes = [8, 32], strides = [1, 1]} : vector<8x128xf32> to vector<8x32xf32>
    %75 = vector.extract_strided_slice %70 {offsets = [0, 96], sizes = [8, 32], strides = [1, 1]} : vector<8x128xf32> to vector<8x32xf32>
    %76 = arith.mulf %73, %34 : vector<8x32xf32>
    %77 = arith.mulf %72, %74 : vector<8x32xf32>
    %78 = arith.addf %76, %77 : vector<8x32xf32>
    %79 = math.tanh %78 : vector<8x32xf32>
    %80 = arith.mulf %75, %79 : vector<8x32xf32>
    %81 = arith.truncf %80 : vector<8x32xf32> to vector<8x32xbf16>
    %cst_28 = arith.constant dense<0.000000e+00> : vector<8x128xf32>
    %82 = tpu.matmul %81, %7, %cst_28 {dimension_numbers = #tpu.dot_dimension_numbers<[1], [0], [0], [1], [0, 0, 1, 1], [], []>} : vector<8x32xbf16>, vector<32x128xbf16>, vector<8x128xf32> -> vector<8x128xf32>
    %83 = arith.addf %59, %82 : vector<8x128xf32>
    %cst_29 = arith.constant 5.000000e-01 : f32
    %84 = vector.broadcast %cst_29 : f32 to vector<8x128xf32>
    %85 = arith.mulf %84, %83 : vector<8x128xf32>
    %86 = math.tanh %85 : vector<8x128xf32>
    %cst_30 = arith.constant 5.000000e-01 : f32
    %87 = vector.broadcast %cst_30 : f32 to vector<8x128xf32>
    %88 = arith.mulf %87, %86 : vector<8x128xf32>
    %cst_31 = arith.constant 5.000000e-01 : f32
    %89 = vector.broadcast %cst_31 : f32 to vector<8x128xf32>
    %90 = arith.addf %88, %89 : vector<8x128xf32>
    %91 = math.tanh %83 : vector<8x128xf32>
    %92 = vector.extract_strided_slice %90 {offsets = [0, 0], sizes = [8, 32], strides = [1, 1]} : vector<8x128xf32> to vector<8x32xf32>
    %93 = vector.extract_strided_slice %90 {offsets = [0, 32], sizes = [8, 32], strides = [1, 1]} : vector<8x128xf32> to vector<8x32xf32>
    %94 = vector.extract_strided_slice %91 {offsets = [0, 64], sizes = [8, 32], strides = [1, 1]} : vector<8x128xf32> to vector<8x32xf32>
    %95 = vector.extract_strided_slice %90 {offsets = [0, 96], sizes = [8, 32], strides = [1, 1]} : vector<8x128xf32> to vector<8x32xf32>
    %96 = arith.mulf %93, %54 : vector<8x32xf32>
    %97 = arith.mulf %92, %94 : vector<8x32xf32>
    %98 = arith.addf %96, %97 : vector<8x32xf32>
    %99 = math.tanh %98 : vector<8x32xf32>
    %100 = arith.mulf %95, %99 : vector<8x32xf32>
    %101 = arith.truncf %100 : vector<8x32xf32> to vector<8x32xbf16>
    %cst_32 = arith.constant dense<0.000000e+00> : vector<8x128xf32>
    %102 = tpu.matmul %101, %8, %cst_32 {dimension_numbers = #tpu.dot_dimension_numbers<[1], [0], [0], [1], [0, 0, 1, 1], [], []>} : vector<8x32xbf16>, vector<32x128xbf16>, vector<8x128xf32> -> vector<8x128xf32>
    %103 = arith.addf %102, %11 : vector<8x128xf32>
    %104 = vector.extract_strided_slice %5 {offsets = [16, 0], sizes = [8, 128], strides = [1, 1]} : vector<64x128xf32> to vector<8x128xf32>
    %105 = arith.truncf %80 : vector<8x32xf32> to vector<8x32xbf16>
    %cst_33 = arith.constant dense<0.000000e+00> : vector<8x128xf32>
    %106 = tpu.matmul %105, %6, %cst_33 {dimension_numbers = #tpu.dot_dimension_numbers<[1], [0], [0], [1], [0, 0, 1, 1], [], []>} : vector<8x32xbf16>, vector<32x128xbf16>, vector<8x128xf32> -> vector<8x128xf32>
    %107 = arith.addf %104, %106 : vector<8x128xf32>
    %cst_34 = arith.constant 5.000000e-01 : f32
    %108 = vector.broadcast %cst_34 : f32 to vector<8x128xf32>
    %109 = arith.mulf %108, %107 : vector<8x128xf32>
    %110 = math.tanh %109 : vector<8x128xf32>
    %cst_35 = arith.constant 5.000000e-01 : f32
    %111 = vector.broadcast %cst_35 : f32 to vector<8x128xf32>
    %112 = arith.mulf %111, %110 : vector<8x128xf32>
    %cst_36 = arith.constant 5.000000e-01 : f32
    %113 = vector.broadcast %cst_36 : f32 to vector<8x128xf32>
    %114 = arith.addf %112, %113 : vector<8x128xf32>
    %115 = math.tanh %107 : vector<8x128xf32>
    %116 = vector.extract_strided_slice %114 {offsets = [0, 0], sizes = [8, 32], strides = [1, 1]} : vector<8x128xf32> to vector<8x32xf32>
    %117 = vector.extract_strided_slice %114 {offsets = [0, 32], sizes = [8, 32], strides = [1, 1]} : vector<8x128xf32> to vector<8x32xf32>
    %118 = vector.extract_strided_slice %115 {offsets = [0, 64], sizes = [8, 32], strides = [1, 1]} : vector<8x128xf32> to vector<8x32xf32>
    %119 = vector.extract_strided_slice %114 {offsets = [0, 96], sizes = [8, 32], strides = [1, 1]} : vector<8x128xf32> to vector<8x32xf32>
    %120 = arith.mulf %117, %78 : vector<8x32xf32>
    %121 = arith.mulf %116, %118 : vector<8x32xf32>
    %122 = arith.addf %120, %121 : vector<8x32xf32>
    %123 = math.tanh %122 : vector<8x32xf32>
    %124 = arith.mulf %119, %123 : vector<8x32xf32>
    %125 = arith.truncf %124 : vector<8x32xf32> to vector<8x32xbf16>
    %cst_37 = arith.constant dense<0.000000e+00> : vector<8x128xf32>
    %126 = tpu.matmul %125, %7, %cst_37 {dimension_numbers = #tpu.dot_dimension_numbers<[1], [0], [0], [1], [0, 0, 1, 1], [], []>} : vector<8x32xbf16>, vector<32x128xbf16>, vector<8x128xf32> -> vector<8x128xf32>
    %127 = arith.addf %103, %126 : vector<8x128xf32>
    %cst_38 = arith.constant 5.000000e-01 : f32
    %128 = vector.broadcast %cst_38 : f32 to vector<8x128xf32>
    %129 = arith.mulf %128, %127 : vector<8x128xf32>
    %130 = math.tanh %129 : vector<8x128xf32>
    %cst_39 = arith.constant 5.000000e-01 : f32
    %131 = vector.broadcast %cst_39 : f32 to vector<8x128xf32>
    %132 = arith.mulf %131, %130 : vector<8x128xf32>
    %cst_40 = arith.constant 5.000000e-01 : f32
    %133 = vector.broadcast %cst_40 : f32 to vector<8x128xf32>
    %134 = arith.addf %132, %133 : vector<8x128xf32>
    %135 = math.tanh %127 : vector<8x128xf32>
    %136 = vector.extract_strided_slice %134 {offsets = [0, 0], sizes = [8, 32], strides = [1, 1]} : vector<8x128xf32> to vector<8x32xf32>
    %137 = vector.extract_strided_slice %134 {offsets = [0, 32], sizes = [8, 32], strides = [1, 1]} : vector<8x128xf32> to vector<8x32xf32>
    %138 = vector.extract_strided_slice %135 {offsets = [0, 64], sizes = [8, 32], strides = [1, 1]} : vector<8x128xf32> to vector<8x32xf32>
    %139 = vector.extract_strided_slice %134 {offsets = [0, 96], sizes = [8, 32], strides = [1, 1]} : vector<8x128xf32> to vector<8x32xf32>
    %140 = arith.mulf %137, %98 : vector<8x32xf32>
    %141 = arith.mulf %136, %138 : vector<8x32xf32>
    %142 = arith.addf %140, %141 : vector<8x32xf32>
    %143 = math.tanh %142 : vector<8x32xf32>
    %144 = arith.mulf %139, %143 : vector<8x32xf32>
    %145 = arith.truncf %144 : vector<8x32xf32> to vector<8x32xbf16>
    %cst_41 = arith.constant dense<0.000000e+00> : vector<8x128xf32>
    %146 = tpu.matmul %145, %8, %cst_41 {dimension_numbers = #tpu.dot_dimension_numbers<[1], [0], [0], [1], [0, 0, 1, 1], [], []>} : vector<8x32xbf16>, vector<32x128xbf16>, vector<8x128xf32> -> vector<8x128xf32>
    %147 = arith.addf %146, %11 : vector<8x128xf32>
    %148 = vector.extract_strided_slice %5 {offsets = [24, 0], sizes = [8, 128], strides = [1, 1]} : vector<64x128xf32> to vector<8x128xf32>
    %149 = arith.truncf %124 : vector<8x32xf32> to vector<8x32xbf16>
    %cst_42 = arith.constant dense<0.000000e+00> : vector<8x128xf32>
    %150 = tpu.matmul %149, %6, %cst_42 {dimension_numbers = #tpu.dot_dimension_numbers<[1], [0], [0], [1], [0, 0, 1, 1], [], []>} : vector<8x32xbf16>, vector<32x128xbf16>, vector<8x128xf32> -> vector<8x128xf32>
    %151 = arith.addf %148, %150 : vector<8x128xf32>
    %cst_43 = arith.constant 5.000000e-01 : f32
    %152 = vector.broadcast %cst_43 : f32 to vector<8x128xf32>
    %153 = arith.mulf %152, %151 : vector<8x128xf32>
    %154 = math.tanh %153 : vector<8x128xf32>
    %cst_44 = arith.constant 5.000000e-01 : f32
    %155 = vector.broadcast %cst_44 : f32 to vector<8x128xf32>
    %156 = arith.mulf %155, %154 : vector<8x128xf32>
    %cst_45 = arith.constant 5.000000e-01 : f32
    %157 = vector.broadcast %cst_45 : f32 to vector<8x128xf32>
    %158 = arith.addf %156, %157 : vector<8x128xf32>
    %159 = math.tanh %151 : vector<8x128xf32>
    %160 = vector.extract_strided_slice %158 {offsets = [0, 0], sizes = [8, 32], strides = [1, 1]} : vector<8x128xf32> to vector<8x32xf32>
    %161 = vector.extract_strided_slice %158 {offsets = [0, 32], sizes = [8, 32], strides = [1, 1]} : vector<8x128xf32> to vector<8x32xf32>
    %162 = vector.extract_strided_slice %159 {offsets = [0, 64], sizes = [8, 32], strides = [1, 1]} : vector<8x128xf32> to vector<8x32xf32>
    %163 = vector.extract_strided_slice %158 {offsets = [0, 96], sizes = [8, 32], strides = [1, 1]} : vector<8x128xf32> to vector<8x32xf32>
    %164 = arith.mulf %161, %122 : vector<8x32xf32>
    %165 = arith.mulf %160, %162 : vector<8x32xf32>
    %166 = arith.addf %164, %165 : vector<8x32xf32>
    %167 = math.tanh %166 : vector<8x32xf32>
    %168 = arith.mulf %163, %167 : vector<8x32xf32>
    %169 = arith.truncf %168 : vector<8x32xf32> to vector<8x32xbf16>
    %cst_46 = arith.constant dense<0.000000e+00> : vector<8x128xf32>
    %170 = tpu.matmul %169, %7, %cst_46 {dimension_numbers = #tpu.dot_dimension_numbers<[1], [0], [0], [1], [0, 0, 1, 1], [], []>} : vector<8x32xbf16>, vector<32x128xbf16>, vector<8x128xf32> -> vector<8x128xf32>
    %171 = arith.addf %147, %170 : vector<8x128xf32>
    %cst_47 = arith.constant 5.000000e-01 : f32
    %172 = vector.broadcast %cst_47 : f32 to vector<8x128xf32>
    %173 = arith.mulf %172, %171 : vector<8x128xf32>
    %174 = math.tanh %173 : vector<8x128xf32>
    %cst_48 = arith.constant 5.000000e-01 : f32
    %175 = vector.broadcast %cst_48 : f32 to vector<8x128xf32>
    %176 = arith.mulf %175, %174 : vector<8x128xf32>
    %cst_49 = arith.constant 5.000000e-01 : f32
    %177 = vector.broadcast %cst_49 : f32 to vector<8x128xf32>
    %178 = arith.addf %176, %177 : vector<8x128xf32>
    %179 = math.tanh %171 : vector<8x128xf32>
    %180 = vector.extract_strided_slice %178 {offsets = [0, 0], sizes = [8, 32], strides = [1, 1]} : vector<8x128xf32> to vector<8x32xf32>
    %181 = vector.extract_strided_slice %178 {offsets = [0, 32], sizes = [8, 32], strides = [1, 1]} : vector<8x128xf32> to vector<8x32xf32>
    %182 = vector.extract_strided_slice %179 {offsets = [0, 64], sizes = [8, 32], strides = [1, 1]} : vector<8x128xf32> to vector<8x32xf32>
    %183 = vector.extract_strided_slice %178 {offsets = [0, 96], sizes = [8, 32], strides = [1, 1]} : vector<8x128xf32> to vector<8x32xf32>
    %184 = arith.mulf %181, %142 : vector<8x32xf32>
    %185 = arith.mulf %180, %182 : vector<8x32xf32>
    %186 = arith.addf %184, %185 : vector<8x32xf32>
    %187 = math.tanh %186 : vector<8x32xf32>
    %188 = arith.mulf %183, %187 : vector<8x32xf32>
    %189 = arith.truncf %188 : vector<8x32xf32> to vector<8x32xbf16>
    %cst_50 = arith.constant dense<0.000000e+00> : vector<8x128xf32>
    %190 = tpu.matmul %189, %8, %cst_50 {dimension_numbers = #tpu.dot_dimension_numbers<[1], [0], [0], [1], [0, 0, 1, 1], [], []>} : vector<8x32xbf16>, vector<32x128xbf16>, vector<8x128xf32> -> vector<8x128xf32>
    %191 = arith.addf %190, %11 : vector<8x128xf32>
    %192 = vector.extract_strided_slice %5 {offsets = [32, 0], sizes = [8, 128], strides = [1, 1]} : vector<64x128xf32> to vector<8x128xf32>
    %193 = arith.truncf %168 : vector<8x32xf32> to vector<8x32xbf16>
    %cst_51 = arith.constant dense<0.000000e+00> : vector<8x128xf32>
    %194 = tpu.matmul %193, %6, %cst_51 {dimension_numbers = #tpu.dot_dimension_numbers<[1], [0], [0], [1], [0, 0, 1, 1], [], []>} : vector<8x32xbf16>, vector<32x128xbf16>, vector<8x128xf32> -> vector<8x128xf32>
    %195 = arith.addf %192, %194 : vector<8x128xf32>
    %cst_52 = arith.constant 5.000000e-01 : f32
    %196 = vector.broadcast %cst_52 : f32 to vector<8x128xf32>
    %197 = arith.mulf %196, %195 : vector<8x128xf32>
    %198 = math.tanh %197 : vector<8x128xf32>
    %cst_53 = arith.constant 5.000000e-01 : f32
    %199 = vector.broadcast %cst_53 : f32 to vector<8x128xf32>
    %200 = arith.mulf %199, %198 : vector<8x128xf32>
    %cst_54 = arith.constant 5.000000e-01 : f32
    %201 = vector.broadcast %cst_54 : f32 to vector<8x128xf32>
    %202 = arith.addf %200, %201 : vector<8x128xf32>
    %203 = math.tanh %195 : vector<8x128xf32>
    %204 = vector.extract_strided_slice %202 {offsets = [0, 0], sizes = [8, 32], strides = [1, 1]} : vector<8x128xf32> to vector<8x32xf32>
    %205 = vector.extract_strided_slice %202 {offsets = [0, 32], sizes = [8, 32], strides = [1, 1]} : vector<8x128xf32> to vector<8x32xf32>
    %206 = vector.extract_strided_slice %203 {offsets = [0, 64], sizes = [8, 32], strides = [1, 1]} : vector<8x128xf32> to vector<8x32xf32>
    %207 = vector.extract_strided_slice %202 {offsets = [0, 96], sizes = [8, 32], strides = [1, 1]} : vector<8x128xf32> to vector<8x32xf32>
    %208 = arith.mulf %205, %166 : vector<8x32xf32>
    %209 = arith.mulf %204, %206 : vector<8x32xf32>
    %210 = arith.addf %208, %209 : vector<8x32xf32>
    %211 = math.tanh %210 : vector<8x32xf32>
    %212 = arith.mulf %207, %211 : vector<8x32xf32>
    %213 = arith.truncf %212 : vector<8x32xf32> to vector<8x32xbf16>
    %cst_55 = arith.constant dense<0.000000e+00> : vector<8x128xf32>
    %214 = tpu.matmul %213, %7, %cst_55 {dimension_numbers = #tpu.dot_dimension_numbers<[1], [0], [0], [1], [0, 0, 1, 1], [], []>} : vector<8x32xbf16>, vector<32x128xbf16>, vector<8x128xf32> -> vector<8x128xf32>
    %215 = arith.addf %191, %214 : vector<8x128xf32>
    %cst_56 = arith.constant 5.000000e-01 : f32
    %216 = vector.broadcast %cst_56 : f32 to vector<8x128xf32>
    %217 = arith.mulf %216, %215 : vector<8x128xf32>
    %218 = math.tanh %217 : vector<8x128xf32>
    %cst_57 = arith.constant 5.000000e-01 : f32
    %219 = vector.broadcast %cst_57 : f32 to vector<8x128xf32>
    %220 = arith.mulf %219, %218 : vector<8x128xf32>
    %cst_58 = arith.constant 5.000000e-01 : f32
    %221 = vector.broadcast %cst_58 : f32 to vector<8x128xf32>
    %222 = arith.addf %220, %221 : vector<8x128xf32>
    %223 = math.tanh %215 : vector<8x128xf32>
    %224 = vector.extract_strided_slice %222 {offsets = [0, 0], sizes = [8, 32], strides = [1, 1]} : vector<8x128xf32> to vector<8x32xf32>
    %225 = vector.extract_strided_slice %222 {offsets = [0, 32], sizes = [8, 32], strides = [1, 1]} : vector<8x128xf32> to vector<8x32xf32>
    %226 = vector.extract_strided_slice %223 {offsets = [0, 64], sizes = [8, 32], strides = [1, 1]} : vector<8x128xf32> to vector<8x32xf32>
    %227 = vector.extract_strided_slice %222 {offsets = [0, 96], sizes = [8, 32], strides = [1, 1]} : vector<8x128xf32> to vector<8x32xf32>
    %228 = arith.mulf %225, %186 : vector<8x32xf32>
    %229 = arith.mulf %224, %226 : vector<8x32xf32>
    %230 = arith.addf %228, %229 : vector<8x32xf32>
    %231 = math.tanh %230 : vector<8x32xf32>
    %232 = arith.mulf %227, %231 : vector<8x32xf32>
    %233 = arith.truncf %232 : vector<8x32xf32> to vector<8x32xbf16>
    %cst_59 = arith.constant dense<0.000000e+00> : vector<8x128xf32>
    %234 = tpu.matmul %233, %8, %cst_59 {dimension_numbers = #tpu.dot_dimension_numbers<[1], [0], [0], [1], [0, 0, 1, 1], [], []>} : vector<8x32xbf16>, vector<32x128xbf16>, vector<8x128xf32> -> vector<8x128xf32>
    %235 = arith.addf %234, %11 : vector<8x128xf32>
    %236 = vector.extract_strided_slice %5 {offsets = [40, 0], sizes = [8, 128], strides = [1, 1]} : vector<64x128xf32> to vector<8x128xf32>
    %237 = arith.truncf %212 : vector<8x32xf32> to vector<8x32xbf16>
    %cst_60 = arith.constant dense<0.000000e+00> : vector<8x128xf32>
    %238 = tpu.matmul %237, %6, %cst_60 {dimension_numbers = #tpu.dot_dimension_numbers<[1], [0], [0], [1], [0, 0, 1, 1], [], []>} : vector<8x32xbf16>, vector<32x128xbf16>, vector<8x128xf32> -> vector<8x128xf32>
    %239 = arith.addf %236, %238 : vector<8x128xf32>
    %cst_61 = arith.constant 5.000000e-01 : f32
    %240 = vector.broadcast %cst_61 : f32 to vector<8x128xf32>
    %241 = arith.mulf %240, %239 : vector<8x128xf32>
    %242 = math.tanh %241 : vector<8x128xf32>
    %cst_62 = arith.constant 5.000000e-01 : f32
    %243 = vector.broadcast %cst_62 : f32 to vector<8x128xf32>
    %244 = arith.mulf %243, %242 : vector<8x128xf32>
    %cst_63 = arith.constant 5.000000e-01 : f32
    %245 = vector.broadcast %cst_63 : f32 to vector<8x128xf32>
    %246 = arith.addf %244, %245 : vector<8x128xf32>
    %247 = math.tanh %239 : vector<8x128xf32>
    %248 = vector.extract_strided_slice %246 {offsets = [0, 0], sizes = [8, 32], strides = [1, 1]} : vector<8x128xf32> to vector<8x32xf32>
    %249 = vector.extract_strided_slice %246 {offsets = [0, 32], sizes = [8, 32], strides = [1, 1]} : vector<8x128xf32> to vector<8x32xf32>
    %250 = vector.extract_strided_slice %247 {offsets = [0, 64], sizes = [8, 32], strides = [1, 1]} : vector<8x128xf32> to vector<8x32xf32>
    %251 = vector.extract_strided_slice %246 {offsets = [0, 96], sizes = [8, 32], strides = [1, 1]} : vector<8x128xf32> to vector<8x32xf32>
    %252 = arith.mulf %249, %210 : vector<8x32xf32>
    %253 = arith.mulf %248, %250 : vector<8x32xf32>
    %254 = arith.addf %252, %253 : vector<8x32xf32>
    %255 = math.tanh %254 : vector<8x32xf32>
    %256 = arith.mulf %251, %255 : vector<8x32xf32>
    %257 = arith.truncf %256 : vector<8x32xf32> to vector<8x32xbf16>
    %cst_64 = arith.constant dense<0.000000e+00> : vector<8x128xf32>
    %258 = tpu.matmul %257, %7, %cst_64 {dimension_numbers = #tpu.dot_dimension_numbers<[1], [0], [0], [1], [0, 0, 1, 1], [], []>} : vector<8x32xbf16>, vector<32x128xbf16>, vector<8x128xf32> -> vector<8x128xf32>
    %259 = arith.addf %235, %258 : vector<8x128xf32>
    %cst_65 = arith.constant 5.000000e-01 : f32
    %260 = vector.broadcast %cst_65 : f32 to vector<8x128xf32>
    %261 = arith.mulf %260, %259 : vector<8x128xf32>
    %262 = math.tanh %261 : vector<8x128xf32>
    %cst_66 = arith.constant 5.000000e-01 : f32
    %263 = vector.broadcast %cst_66 : f32 to vector<8x128xf32>
    %264 = arith.mulf %263, %262 : vector<8x128xf32>
    %cst_67 = arith.constant 5.000000e-01 : f32
    %265 = vector.broadcast %cst_67 : f32 to vector<8x128xf32>
    %266 = arith.addf %264, %265 : vector<8x128xf32>
    %267 = math.tanh %259 : vector<8x128xf32>
    %268 = vector.extract_strided_slice %266 {offsets = [0, 0], sizes = [8, 32], strides = [1, 1]} : vector<8x128xf32> to vector<8x32xf32>
    %269 = vector.extract_strided_slice %266 {offsets = [0, 32], sizes = [8, 32], strides = [1, 1]} : vector<8x128xf32> to vector<8x32xf32>
    %270 = vector.extract_strided_slice %267 {offsets = [0, 64], sizes = [8, 32], strides = [1, 1]} : vector<8x128xf32> to vector<8x32xf32>
    %271 = vector.extract_strided_slice %266 {offsets = [0, 96], sizes = [8, 32], strides = [1, 1]} : vector<8x128xf32> to vector<8x32xf32>
    %272 = arith.mulf %269, %230 : vector<8x32xf32>
    %273 = arith.mulf %268, %270 : vector<8x32xf32>
    %274 = arith.addf %272, %273 : vector<8x32xf32>
    %275 = math.tanh %274 : vector<8x32xf32>
    %276 = arith.mulf %271, %275 : vector<8x32xf32>
    %277 = arith.truncf %276 : vector<8x32xf32> to vector<8x32xbf16>
    %cst_68 = arith.constant dense<0.000000e+00> : vector<8x128xf32>
    %278 = tpu.matmul %277, %8, %cst_68 {dimension_numbers = #tpu.dot_dimension_numbers<[1], [0], [0], [1], [0, 0, 1, 1], [], []>} : vector<8x32xbf16>, vector<32x128xbf16>, vector<8x128xf32> -> vector<8x128xf32>
    %279 = arith.addf %278, %11 : vector<8x128xf32>
    %280 = vector.extract_strided_slice %5 {offsets = [48, 0], sizes = [8, 128], strides = [1, 1]} : vector<64x128xf32> to vector<8x128xf32>
    %281 = arith.truncf %256 : vector<8x32xf32> to vector<8x32xbf16>
    %cst_69 = arith.constant dense<0.000000e+00> : vector<8x128xf32>
    %282 = tpu.matmul %281, %6, %cst_69 {dimension_numbers = #tpu.dot_dimension_numbers<[1], [0], [0], [1], [0, 0, 1, 1], [], []>} : vector<8x32xbf16>, vector<32x128xbf16>, vector<8x128xf32> -> vector<8x128xf32>
    %283 = arith.addf %280, %282 : vector<8x128xf32>
    %cst_70 = arith.constant 5.000000e-01 : f32
    %284 = vector.broadcast %cst_70 : f32 to vector<8x128xf32>
    %285 = arith.mulf %284, %283 : vector<8x128xf32>
    %286 = math.tanh %285 : vector<8x128xf32>
    %cst_71 = arith.constant 5.000000e-01 : f32
    %287 = vector.broadcast %cst_71 : f32 to vector<8x128xf32>
    %288 = arith.mulf %287, %286 : vector<8x128xf32>
    %cst_72 = arith.constant 5.000000e-01 : f32
    %289 = vector.broadcast %cst_72 : f32 to vector<8x128xf32>
    %290 = arith.addf %288, %289 : vector<8x128xf32>
    %291 = math.tanh %283 : vector<8x128xf32>
    %292 = vector.extract_strided_slice %290 {offsets = [0, 0], sizes = [8, 32], strides = [1, 1]} : vector<8x128xf32> to vector<8x32xf32>
    %293 = vector.extract_strided_slice %290 {offsets = [0, 32], sizes = [8, 32], strides = [1, 1]} : vector<8x128xf32> to vector<8x32xf32>
    %294 = vector.extract_strided_slice %291 {offsets = [0, 64], sizes = [8, 32], strides = [1, 1]} : vector<8x128xf32> to vector<8x32xf32>
    %295 = vector.extract_strided_slice %290 {offsets = [0, 96], sizes = [8, 32], strides = [1, 1]} : vector<8x128xf32> to vector<8x32xf32>
    %296 = arith.mulf %293, %254 : vector<8x32xf32>
    %297 = arith.mulf %292, %294 : vector<8x32xf32>
    %298 = arith.addf %296, %297 : vector<8x32xf32>
    %299 = math.tanh %298 : vector<8x32xf32>
    %300 = arith.mulf %295, %299 : vector<8x32xf32>
    %301 = arith.truncf %300 : vector<8x32xf32> to vector<8x32xbf16>
    %cst_73 = arith.constant dense<0.000000e+00> : vector<8x128xf32>
    %302 = tpu.matmul %301, %7, %cst_73 {dimension_numbers = #tpu.dot_dimension_numbers<[1], [0], [0], [1], [0, 0, 1, 1], [], []>} : vector<8x32xbf16>, vector<32x128xbf16>, vector<8x128xf32> -> vector<8x128xf32>
    %303 = arith.addf %279, %302 : vector<8x128xf32>
    %cst_74 = arith.constant 5.000000e-01 : f32
    %304 = vector.broadcast %cst_74 : f32 to vector<8x128xf32>
    %305 = arith.mulf %304, %303 : vector<8x128xf32>
    %306 = math.tanh %305 : vector<8x128xf32>
    %cst_75 = arith.constant 5.000000e-01 : f32
    %307 = vector.broadcast %cst_75 : f32 to vector<8x128xf32>
    %308 = arith.mulf %307, %306 : vector<8x128xf32>
    %cst_76 = arith.constant 5.000000e-01 : f32
    %309 = vector.broadcast %cst_76 : f32 to vector<8x128xf32>
    %310 = arith.addf %308, %309 : vector<8x128xf32>
    %311 = math.tanh %303 : vector<8x128xf32>
    %312 = vector.extract_strided_slice %310 {offsets = [0, 0], sizes = [8, 32], strides = [1, 1]} : vector<8x128xf32> to vector<8x32xf32>
    %313 = vector.extract_strided_slice %310 {offsets = [0, 32], sizes = [8, 32], strides = [1, 1]} : vector<8x128xf32> to vector<8x32xf32>
    %314 = vector.extract_strided_slice %311 {offsets = [0, 64], sizes = [8, 32], strides = [1, 1]} : vector<8x128xf32> to vector<8x32xf32>
    %315 = vector.extract_strided_slice %310 {offsets = [0, 96], sizes = [8, 32], strides = [1, 1]} : vector<8x128xf32> to vector<8x32xf32>
    %316 = arith.mulf %313, %274 : vector<8x32xf32>
    %317 = arith.mulf %312, %314 : vector<8x32xf32>
    %318 = arith.addf %316, %317 : vector<8x32xf32>
    %319 = math.tanh %318 : vector<8x32xf32>
    %320 = arith.mulf %315, %319 : vector<8x32xf32>
    %321 = arith.truncf %320 : vector<8x32xf32> to vector<8x32xbf16>
    %cst_77 = arith.constant dense<0.000000e+00> : vector<8x128xf32>
    %322 = tpu.matmul %321, %8, %cst_77 {dimension_numbers = #tpu.dot_dimension_numbers<[1], [0], [0], [1], [0, 0, 1, 1], [], []>} : vector<8x32xbf16>, vector<32x128xbf16>, vector<8x128xf32> -> vector<8x128xf32>
    %323 = arith.addf %322, %11 : vector<8x128xf32>
    %324 = vector.extract_strided_slice %5 {offsets = [56, 0], sizes = [8, 128], strides = [1, 1]} : vector<64x128xf32> to vector<8x128xf32>
    %325 = arith.truncf %300 : vector<8x32xf32> to vector<8x32xbf16>
    %cst_78 = arith.constant dense<0.000000e+00> : vector<8x128xf32>
    %326 = tpu.matmul %325, %6, %cst_78 {dimension_numbers = #tpu.dot_dimension_numbers<[1], [0], [0], [1], [0, 0, 1, 1], [], []>} : vector<8x32xbf16>, vector<32x128xbf16>, vector<8x128xf32> -> vector<8x128xf32>
    %327 = arith.addf %324, %326 : vector<8x128xf32>
    %cst_79 = arith.constant 5.000000e-01 : f32
    %328 = vector.broadcast %cst_79 : f32 to vector<8x128xf32>
    %329 = arith.mulf %328, %327 : vector<8x128xf32>
    %330 = math.tanh %329 : vector<8x128xf32>
    %cst_80 = arith.constant 5.000000e-01 : f32
    %331 = vector.broadcast %cst_80 : f32 to vector<8x128xf32>
    %332 = arith.mulf %331, %330 : vector<8x128xf32>
    %cst_81 = arith.constant 5.000000e-01 : f32
    %333 = vector.broadcast %cst_81 : f32 to vector<8x128xf32>
    %334 = arith.addf %332, %333 : vector<8x128xf32>
    %335 = math.tanh %327 : vector<8x128xf32>
    %336 = vector.extract_strided_slice %334 {offsets = [0, 0], sizes = [8, 32], strides = [1, 1]} : vector<8x128xf32> to vector<8x32xf32>
    %337 = vector.extract_strided_slice %334 {offsets = [0, 32], sizes = [8, 32], strides = [1, 1]} : vector<8x128xf32> to vector<8x32xf32>
    %338 = vector.extract_strided_slice %335 {offsets = [0, 64], sizes = [8, 32], strides = [1, 1]} : vector<8x128xf32> to vector<8x32xf32>
    %339 = vector.extract_strided_slice %334 {offsets = [0, 96], sizes = [8, 32], strides = [1, 1]} : vector<8x128xf32> to vector<8x32xf32>
    %340 = arith.mulf %337, %298 : vector<8x32xf32>
    %341 = arith.mulf %336, %338 : vector<8x32xf32>
    %342 = arith.addf %340, %341 : vector<8x32xf32>
    %343 = math.tanh %342 : vector<8x32xf32>
    %344 = arith.mulf %339, %343 : vector<8x32xf32>
    %345 = arith.truncf %344 : vector<8x32xf32> to vector<8x32xbf16>
    %cst_82 = arith.constant dense<0.000000e+00> : vector<8x128xf32>
    %346 = tpu.matmul %345, %7, %cst_82 {dimension_numbers = #tpu.dot_dimension_numbers<[1], [0], [0], [1], [0, 0, 1, 1], [], []>} : vector<8x32xbf16>, vector<32x128xbf16>, vector<8x128xf32> -> vector<8x128xf32>
    %347 = arith.addf %323, %346 : vector<8x128xf32>
    %cst_83 = arith.constant 5.000000e-01 : f32
    %348 = vector.broadcast %cst_83 : f32 to vector<8x128xf32>
    %349 = arith.mulf %348, %347 : vector<8x128xf32>
    %350 = math.tanh %349 : vector<8x128xf32>
    %cst_84 = arith.constant 5.000000e-01 : f32
    %351 = vector.broadcast %cst_84 : f32 to vector<8x128xf32>
    %352 = arith.mulf %351, %350 : vector<8x128xf32>
    %cst_85 = arith.constant 5.000000e-01 : f32
    %353 = vector.broadcast %cst_85 : f32 to vector<8x128xf32>
    %354 = arith.addf %352, %353 : vector<8x128xf32>
    %355 = math.tanh %347 : vector<8x128xf32>
    %356 = vector.extract_strided_slice %354 {offsets = [0, 0], sizes = [8, 32], strides = [1, 1]} : vector<8x128xf32> to vector<8x32xf32>
    %357 = vector.extract_strided_slice %354 {offsets = [0, 32], sizes = [8, 32], strides = [1, 1]} : vector<8x128xf32> to vector<8x32xf32>
    %358 = vector.extract_strided_slice %355 {offsets = [0, 64], sizes = [8, 32], strides = [1, 1]} : vector<8x128xf32> to vector<8x32xf32>
    %359 = vector.extract_strided_slice %354 {offsets = [0, 96], sizes = [8, 32], strides = [1, 1]} : vector<8x128xf32> to vector<8x32xf32>
    %360 = arith.mulf %357, %318 : vector<8x32xf32>
    %361 = arith.mulf %356, %358 : vector<8x32xf32>
    %362 = arith.addf %360, %361 : vector<8x32xf32>
    %363 = math.tanh %362 : vector<8x32xf32>
    %364 = arith.mulf %359, %363 : vector<8x32xf32>
    %c0_86 = arith.constant 0 : index
    %c0_87 = arith.constant 0 : index
    %365 = vector.load %arg7[%c0_86, %c0_87] : memref<32x8xf32, #tpu.memory_space<vmem>>, vector<32x8xf32>
    %cst_88 = arith.constant dense<0.000000e+00> : vector<8x8xf32>
    %366 = tpu.matmul %364, %365, %cst_88 {dimension_numbers = #tpu.dot_dimension_numbers<[1], [0], [0], [1], [0, 0, 1, 1], [], []>} : vector<8x32xf32>, vector<32x8xf32>, vector<8x8xf32> -> vector<8x8xf32>
    %c0_89 = arith.constant 0 : index
    %c0_90 = arith.constant 0 : index
    %367 = vector.load %arg8[%c0_89, %c0_90] : memref<1x8xf32, #tpu.memory_space<vmem>>, vector<1x8xf32>
    %368 = vector.broadcast %367 : vector<1x8xf32> to vector<8x8xf32>
    %369 = arith.addf %366, %368 : vector<8x8xf32>
    %c0_91 = arith.constant 0 : index
    %c0_92 = arith.constant 0 : index
    %370 = vector.load %arg9[%c0_91, %c0_92] : memref<8x8xf32, #tpu.memory_space<vmem>>, vector<8x8xf32>
    tpu.vector_store %arg9[%c0_91, %c0_92], %369 {strides = array<i32>} : memref<8x8xf32, #tpu.memory_space<vmem>>, vector<8x8xf32>,
    return
  }
}

</mosaic_0001>

<llo_original>
// kernel: tpu_custom_call.1
$region0: #{tpu_custom_call.1}
  #allocation0 [shape = 'u32[]', space=smem, size = 0x4, offset = 0x4, fixed_abs, tag = 'smem constant byte address 0x4 - core index']
  #allocation1 [shape = 'u32[144,128]{1,0:T(1,128)}', space=vmem, size = 0x12000, scoped, tag = 'internal scratch']
  %s0 = inlined_call_operand.vmem [shape: f32[64,8], index: 0, kind: input, shape index: {}]
  %s1 = inlined_call_operand.vmem [shape: f32[8,128], index: 1, kind: input, shape index: {}]
  %s2 = inlined_call_operand.vmem [shape: f32[1,128], index: 2, kind: input, shape index: {}]
  %s3 = inlined_call_operand.vmem [shape: bf16[32,128], index: 3, kind: input, shape index: {}]
  %s4 = inlined_call_operand.vmem [shape: bf16[32,128], index: 4, kind: input, shape index: {}]
  %s5 = inlined_call_operand.vmem [shape: bf16[32,128], index: 5, kind: input, shape index: {}]
  %s6 = inlined_call_operand.vmem [shape: f32[1,128], index: 6, kind: input, shape index: {}]
  %s7 = inlined_call_operand.vmem [shape: f32[32,8], index: 7, kind: input, shape index: {}]
  %s8 = inlined_call_operand.vmem [shape: f32[1,8], index: 8, kind: input, shape index: {}]
  %s9 = inlined_call_operand.hbm [shape: f32[8,8], index: 9, kind: output, shape index: {}]
  %s10 = sld [smem:[#allocation0]]
  $region46: #{tpu_custom_call.1} parent=0
    _
  %s12 = ssub.s32 1, %s10
  %s13 = scalar_select 0, %s12, %s10
  $region1: #{tpu_custom_call.1} parent=0
    #allocation2 [shape = 'u8[4096]{0}', space=vmem, size = 0x1000, scoped, tag = 'output window, operand 0, single buffered']
    #allocation3 [shape = 's32[1]{0}', space=sflag, size = 0x4, scoped, tag = 'scoped memory for tpu_custom_call.1']
    %14 = vsyncpa [#allocation3], 0
    // Predicated region
    $region2: #{tpu_custom_call.1} parent=1 // pred_check
      _
    $region3: #{tpu_custom_call.1} parent=1 // pred_check_branch
      %16 = sbr.rel (0) target = $region5
    $region4: #{tpu_custom_call.1} parent=1 // pred_region
      _
    $region5: #{tpu_custom_call.1} parent=1 // pred_fallthru
      _
    // Predicated region
    $region6: #{tpu_custom_call.1} parent=1 // pred_check
      _
    $region7: #{tpu_custom_call.1} parent=1 // pred_check_branch
      %18 = sbr.rel (0) target = $region9
    $region8: #{tpu_custom_call.1} parent=1 // pred_region
      _
    $region9: #{tpu_custom_call.1} parent=1 // pred_fallthru
      _
    // Predicated region
    $region10: #{tpu_custom_call.1} parent=1 // pred_check
      _
    $region11: #{tpu_custom_call.1} parent=1 // pred_check_branch
      %20 = sbr.rel (0) target = $region13
    $region12: #{tpu_custom_call.1} parent=1 // pred_region
      _
    $region13: #{tpu_custom_call.1} parent=1 // pred_fallthru
      _
    // Predicated region
    $region14: #{tpu_custom_call.1} parent=1 // pred_check
      _
    $region15: #{tpu_custom_call.1} parent=1 // pred_check_branch
      %22 = sbr.rel (0) target = $region17
    $region16: #{tpu_custom_call.1} parent=1 // pred_region
      _
    $region17: #{tpu_custom_call.1} parent=1 // pred_fallthru
      _
    // Predicated region
    $region18: #{tpu_custom_call.1} parent=1 // pred_check
      _
    $region19: #{tpu_custom_call.1} parent=1 // pred_check_branch
      %24 = sbr.rel (0) target = $region21
    $region20: #{tpu_custom_call.1} parent=1 // pred_region
      _
    $region21: #{tpu_custom_call.1} parent=1 // pred_fallthru
      _
    // Predicated region
    $region22: #{tpu_custom_call.1} parent=1 // pred_check
      _
    $region23: #{tpu_custom_call.1} parent=1 // pred_check_branch
      %26 = sbr.rel (0) target = $region25
    $region24: #{tpu_custom_call.1} parent=1 // pred_region
      _
    $region25: #{tpu_custom_call.1} parent=1 // pred_fallthru
      _
    // Predicated region
    $region26: #{tpu_custom_call.1} parent=1 // pred_check
      _
    $region27: #{tpu_custom_call.1} parent=1 // pred_check_branch
      %28 = sbr.rel (0) target = $region29
    $region28: #{tpu_custom_call.1} parent=1 // pred_region
      _
    $region29: #{tpu_custom_call.1} parent=1 // pred_fallthru
      _
    // Predicated region
    $region30: #{tpu_custom_call.1} parent=1 // pred_check
      _
    $region31: #{tpu_custom_call.1} parent=1 // pred_check_branch
      %30 = sbr.rel (0) target = $region33
    $region32: #{tpu_custom_call.1} parent=1 // pred_region
      _
    $region33: #{tpu_custom_call.1} parent=1 // pred_fallthru
      _
    // Predicated region
    $region34: #{tpu_custom_call.1} parent=1 // pred_check
      _
    $region35: #{tpu_custom_call.1} parent=1 // pred_check_branch
      %32 = sbr.rel (0) target = $region37
    $region36: #{tpu_custom_call.1} parent=1 // pred_region
      _
    $region37: #{tpu_custom_call.1} parent=1 // pred_fallthru
      _
    %v34 = vld [vmem:[%s0] sm:$0xff]
    %v35 = vld [vmem:[%s0 + $0x8] sm:$0xff]
    %v36 = vld [vmem:[%s0 + $0x10] sm:$0xff]
    %v37 = vld [vmem:[%s0 + $0x18] sm:$0xff]
    %v38 = vld [vmem:[%s0 + $0x20] sm:$0xff]
    %v39 = vld [vmem:[%s0 + $0x28] sm:$0xff]
    %v40 = vld [vmem:[%s0 + $0x30] sm:$0xff]
    %v41 = vld [vmem:[%s0 + $0x38] sm:$0xff]
    %v42 = vld [vmem:[%s1] sm:$0xff]
    %v43 = vld [vmem:[%s2] sm:$0x1]
    %v45 = vlaneseq
    %v46 = vshrl.u32 %v45, 7
    %v47 = vsub.s32 0, %v46
    %v48 = vrot.slane %v43, %v47
    %vm50 = vcmask 64512
    %v52 = vsel %vm50, %v34, 0
    %v55 = vsel %vm50, %v35, 0
    %v58 = vsel %vm50, %v36, 0
    %v61 = vsel %vm50, %v37, 0
    %v64 = vsel %vm50, %v38, 0
    %v67 = vsel %vm50, %v39, 0
    %v70 = vsel %vm50, %v40, 0
    %v73 = vsel %vm50, %v41, 0
    %75 = vmatprep.subr.mxu0 0.0
    %76 = vmatpush1.msra.mxu0 %v42
    %77 = vmatprep.subr.mxu0 0.0
    %78 = vmatpush1.msra.mxu0 0.0
    %79 = vmatprep.subr.mxu0 0.0
    %80 = vmatpush1.msra.mxu0 0.0
    %81 = vmatprep.subr.mxu0 0.0
    %82 = vmatpush1.msra.mxu0 0.0
    %83 = vmatprep.subr.mxu0 0.0
    %84 = vmatpush1.msra.mxu0 0.0
    %85 = vmatprep.subr.mxu0 0.0
    %86 = vmatpush1.msra.mxu0 0.0
    %87 = vmatprep.subr.mxu0 0.0
    %88 = vmatpush1.msra.mxu0 0.0
    %89 = vmatprep.subr.mxu0 0.0
    %90 = vmatpush1.msra.mxu0 0.0
    %91 = vmatprep.subr.mxu0 0.0
    %92 = vmatpush1.msra.mxu0 0.0
    %93 = vmatprep.subr.mxu0 0.0
    %94 = vmatpush1.msra.mxu0 0.0
    %95 = vmatprep.subr.mxu0 0.0
    %96 = vmatpush1.msra.mxu0 0.0
    %97 = vmatprep.subr.mxu0 0.0
    %98 = vmatpush1.msra.mxu0 0.0
    %99 = vmatprep.subr.mxu0 0.0
    %100 = vmatpush1.msra.mxu0 0.0
    %101 = vmatprep.subr.mxu0 0.0
    %102 = vmatpush1.msra.mxu0 0.0
    %103 = vmatprep.subr.mxu0 0.0
    %104 = vmatpush1.msra.mxu0 0.0
    %105 = vmatprep.subr.mxu0 0.0
    %106 = vmatpush1.msra.mxu0 0.0
    %107 = vmatprep.subr.mxu0 0.0
    %108 = vmatpush1.msra.mxu0 0.0
    %109 = vmatprep.subr.mxu0 0.0
    %110 = vmatpush1.msra.mxu0 0.0
    %111 = vmatprep.subr.mxu0 0.0
    %112 = vmatpush1.msra.mxu0 0.0
    %113 = vmatprep.subr.mxu0 0.0
    %114 = vmatpush1.msra.mxu0 0.0
    %115 = vmatprep.subr.mxu0 0.0
    %116 = vmatpush1.msra.mxu0 0.0
    %117 = vmatprep.subr.mxu0 0.0
    %118 = vmatpush1.msra.mxu0 0.0
    %119 = vmatprep.subr.mxu0 0.0
    %120 = vmatpush1.msra.mxu0 0.0
    %121 = vmatprep.subr.mxu0 0.0
    %122 = vmatpush1.msra.mxu0 0.0
    %123 = vmatprep.subr.mxu0 0.0
    %124 = vmatpush1.msra.mxu0 0.0
    %125 = vmatprep.subr.mxu0 0.0
    %126 = vmatpush1.msra.mxu0 0.0
    %127 = vmatprep.subr.mxu0 0.0
    %128 = vmatpush1.msra.mxu0 0.0
    %129 = vmatprep.subr.mxu0 0.0
    %130 = vmatpush1.msra.mxu0 0.0
    %131 = vmatprep.subr.mxu0 0.0
    %132 = vmatpush1.msra.mxu0 0.0
    %133 = vmatprep.subr.mxu0 0.0
    %134 = vmatpush1.msra.mxu0 0.0
    %135 = vmatprep.subr.mxu0 0.0
    %136 = vmatpush1.msra.mxu0 0.0
    %137 = vmatprep.subr.mxu0 0.0
    %138 = vmatpush1.msra.mxu0 0.0
    %139 = vmatprep.mubr.f32.mxu0 0.0
    %140 = vmatmul.mubr.f32.gmra.mrb[0].mxu0 %v52
    %v141 = vpop.f32.mrb[0].mxu0
    %v142 = vadd.f32 %v48, %v141
    %v143 = vpop.f32.mrb[0].mxu0
    %144 = vmatprep.mubr.f32.mxu0 0.0
    %145 = vmatmul.mubr.f32.gmra.mrb[0].mxu0 %v55
    %v146 = vpop.f32.mrb[0].mxu0
    %v147 = vadd.f32 %v48, %v146
    %v148 = vpop.f32.mrb[0].mxu0
    %149 = vmatprep.mubr.f32.mxu0 0.0
    %150 = vmatmul.mubr.f32.gmra.mrb[0].mxu0 %v58
    %v151 = vpop.f32.mrb[0].mxu0
    %v152 = vadd.f32 %v48, %v151
    %v153 = vpop.f32.mrb[0].mxu0
    %154 = vmatprep.mubr.f32.mxu0 0.0
    %155 = vmatmul.mubr.f32.gmra.mrb[0].mxu0 %v61
    %v156 = vpop.f32.mrb[0].mxu0
    %v157 = vadd.f32 %v48, %v156
    %v158 = vpop.f32.mrb[0].mxu0
    %159 = vmatprep.mubr.f32.mxu0 0.0
    %160 = vmatmul.mubr.f32.gmra.mrb[0].mxu0 %v64
    %v161 = vpop.f32.mrb[0].mxu0
    %v162 = vadd.f32 %v48, %v161
    %v163 = vpop.f32.mrb[0].mxu0
    %164 = vmatprep.mubr.f32.mxu0 0.0
    %165 = vmatmul.mubr.f32.gmra.mrb[0].mxu0 %v67
    %v166 = vpop.f32.mrb[0].mxu0
    %v167 = vadd.f32 %v48, %v166
    %v168 = vpop.f32.mrb[0].mxu0
    %169 = vmatprep.mubr.f32.mxu0 0.0
    %170 = vmatmul.mubr.f32.gmra.mrb[0].mxu0 %v70
    %v171 = vpop.f32.mrb[0].mxu0
    %v172 = vadd.f32 %v48, %v171
    %v173 = vpop.f32.mrb[0].mxu0
    %174 = vmatprep.mubr.f32.mxu0 0.0
    %175 = vmatmul.mubr.f32.gmra.mrb[0].mxu0 %v73
    %v176 = vpop.f32.mrb[0].mxu0
    %v177 = vadd.f32 %v48, %v176
    %v178 = vpop.f32.mrb[0].mxu0
    %179 = vdwg.mxu0
    %v180 = vld [vmem:[%s3] sm:$0xf]
    %v181 = vld [vmem:[%s3 + $0x4] sm:$0xf]
    %v182 = vld [vmem:[%s3 + $0x8] sm:$0xf]
    %v183 = vld [vmem:[%s3 + $0xc] sm:$0xf]
    %v184 = vld [vmem:[%s4] sm:$0xf]
    %v185 = vld [vmem:[%s4 + $0x4] sm:$0xf]
    %v186 = vld [vmem:[%s4 + $0x8] sm:$0xf]
    %v187 = vld [vmem:[%s4 + $0xc] sm:$0xf]
    %v188 = vld [vmem:[%s5] sm:$0xf]
    %v189 = vld [vmem:[%s5 + $0x4] sm:$0xf]
    %v190 = vld [vmem:[%s5 + $0x8] sm:$0xf]
    %v191 = vld [vmem:[%s5 + $0xc] sm:$0xf]
    %v192 = vld [vmem:[%s6] sm:$0x1]
    %v194 = vlaneseq
    %v195 = vshrl.u32 %v194, 7
    %v196 = vsub.s32 0, %v195
    %v197 = vrot.slane %v192, %v196
    %v203 = vunpack.c.l.b16 %v188
    %v204 = vunpack.c.l.b16 %v189
    %v205 = vunpack.c.l.b16 %v190
    %v206 = vunpack.c.l.b16 %v191
    %v207 = vpack.c.b16 %v204, %v203
    %v208 = vpack.c.b16 %v206, %v205
    %vm211 = vcmask 261120
    %v213 = vsel %vm211, 0, 0
    %215 = vmatprep.subr.bf16.mxu0 0
    %216 = vmatpush1.bf16.msra.mxu0 %v207
    %217 = vmatprep.subr.bf16.mxu0 0
    %218 = vmatpush1.bf16.msra.mxu0 %v208
    %219 = vmatprep.subr.bf16.mxu0 0
    %220 = vmatpush1.bf16.msra.mxu0 0
    %221 = vmatprep.subr.bf16.mxu0 0
    %222 = vmatpush1.bf16.msra.mxu0 0
    %223 = vmatprep.subr.bf16.mxu0 0
    %224 = vmatpush1.bf16.msra.mxu0 0
    %225 = vmatprep.subr.bf16.mxu0 0
    %226 = vmatpush1.bf16.msra.mxu0 0
    %227 = vmatprep.subr.bf16.mxu0 0
    %228 = vmatpush1.bf16.msra.mxu0 0
    %229 = vmatprep.subr.bf16.mxu0 0
    %230 = vmatpush1.bf16.msra.mxu0 0
    %231 = vmatprep.subr.bf16.mxu0 0
    %232 = vmatpush1.bf16.msra.mxu0 0
    %233 = vmatprep.subr.bf16.mxu0 0
    %234 = vmatpush1.bf16.msra.mxu0 0
    %235 = vmatprep.subr.bf16.mxu0 0
    %236 = vmatpush1.bf16.msra.mxu0 0
    %237 = vmatprep.subr.bf16.mxu0 0
    %238 = vmatpush1.bf16.msra.mxu0 0
    %239 = vmatprep.subr.bf16.mxu0 0
    %240 = vmatpush1.bf16.msra.mxu0 0
    %241 = vmatprep.subr.bf16.mxu0 0
    %242 = vmatpush1.bf16.msra.mxu0 0
    %243 = vmatprep.subr.bf16.mxu0 0
    %244 = vmatpush1.bf16.msra.mxu0 0
    %245 = vmatprep.subr.bf16.mxu0 0
    %246 = vmatpush1.bf16.msra.mxu0 0
    %247 = vmatprep.mubr.bf16.mxu0 0
    %248 = vmatmul.mubr.bf16.gmra.mrb[0].mxu0 %v213
    %v249 = vpop.f32.mrb[0].mxu0
    %v250 = vadd.f32 %v197, %v249
    %v251 = vpop.f32.mrb[0].mxu0
    %v252 = vpop.f32.mrb[0].mxu0
    %v253 = vpop.f32.mrb[0].mxu0
    %254 = vdwg.mxu0
    %v259 = vunpack.c.l.b16 %v180
    %v260 = vunpack.c.l.b16 %v181
    %v261 = vunpack.c.l.b16 %v182
    %v262 = vunpack.c.l.b16 %v183
    %v263 = vpack.c.b16 %v260, %v259
    %v264 = vpack.c.b16 %v262, %v261
    %267 = vmatprep.subr.bf16.mxu0 0
    %268 = vmatpush1.bf16.msra.mxu0 %v263
    %269 = vmatprep.subr.bf16.mxu0 0
    %270 = vmatpush1.bf16.msra.mxu0 %v264
    %271 = vmatprep.subr.bf16.mxu0 0
    %272 = vmatpush1.bf16.msra.mxu0 0
    %273 = vmatprep.subr.bf16.mxu0 0
    %274 = vmatpush1.bf16.msra.mxu0 0
    %275 = vmatprep.subr.bf16.mxu0 0
    %276 = vmatpush1.bf16.msra.mxu0 0
    %277 = vmatprep.subr.bf16.mxu0 0
    %278 = vmatpush1.bf16.msra.mxu0 0
    %279 = vmatprep.subr.bf16.mxu0 0
    %280 = vmatpush1.bf16.msra.mxu0 0
    %281 = vmatprep.subr.bf16.mxu0 0
    %282 = vmatpush1.bf16.msra.mxu0 0
    %283 = vmatprep.subr.bf16.mxu0 0
    %284 = vmatpush1.bf16.msra.mxu0 0
    %285 = vmatprep.subr.bf16.mxu0 0
    %286 = vmatpush1.bf16.msra.mxu0 0
    %287 = vmatprep.subr.bf16.mxu0 0
    %288 = vmatpush1.bf16.msra.mxu0 0
    %289 = vmatprep.subr.bf16.mxu0 0
    %290 = vmatpush1.bf16.msra.mxu0 0
    %291 = vmatprep.subr.bf16.mxu0 0
    %292 = vmatpush1.bf16.msra.mxu0 0
    %293 = vmatprep.subr.bf16.mxu0 0
    %294 = vmatpush1.bf16.msra.mxu0 0
    %295 = vmatprep.subr.bf16.mxu0 0
    %296 = vmatpush1.bf16.msra.mxu0 0
    %297 = vmatprep.subr.bf16.mxu0 0
    %298 = vmatpush1.bf16.msra.mxu0 0
    %299 = vmatprep.mubr.bf16.mxu0 0
    %300 = vmatmul.mubr.bf16.gmra.mrb[0].mxu0 %v213
    %v301 = vpop.f32.mrb[0].mxu0
    %v302 = vadd.f32 0.0, %v301
    %v303 = vpop.f32.mrb[0].mxu0
    %v304 = vpop.f32.mrb[0].mxu0
    %v305 = vpop.f32.mrb[0].mxu0
    %306 = vdwg.mxu0
    %v307 = vadd.f32 %v142, %v302
    %v308 = vmul.f32 %v307, 0.5
    %v309 = vtanh.pop %v308
    %v310 = vmul.f32 %v309, 0.5
    %v311 = vadd.f32 %v310, 0.5
    %v312 = vtanh.pop %v307
    %v313 = vmul.f32 %v311, 0.0
    %315 = vrot.lane.b32.xlu0 %v312, 64
    %v316 = vpop.permute.xlu0 %315
    %v318 = vmul.f32 %v311, %v316
    %320 = vrot.lane.b32.xlu0 %v318, 32
    %v321 = vpop.permute.xlu0 %320
    %v323 = vadd.f32 %v313, %v321
    %v324 = vtanh.pop %v323
    %326 = vrot.lane.b32.xlu0 %v324, 64
    %v327 = vpop.permute.xlu0 %326
    %v329 = vmul.f32 %v311, %v327
    %v330 = vpack.c.bf16 %v329, %v329
    %332 = vrot.lane.b32.xlu0 %v330, 32
    %v333 = vpop.permute.xlu0 %332
    %v338 = vunpack.c.l.b16 %v184
    %v339 = vunpack.c.l.b16 %v185
    %v340 = vunpack.c.l.b16 %v186
    %v341 = vunpack.c.l.b16 %v187
    %v342 = vpack.c.b16 %v339, %v338
    %v343 = vpack.c.b16 %v341, %v340
    %v347 = vsel %vm211, %v333, 0
    %349 = vmatprep.subr.bf16.mxu0 0
    %350 = vmatpush1.bf16.msra.mxu0 %v342
    %351 = vmatprep.subr.bf16.mxu0 0
    %352 = vmatpush1.bf16.msra.mxu0 %v343
    %353 = vmatprep.subr.bf16.mxu0 0
    %354 = vmatpush1.bf16.msra.mxu0 0
    %355 = vmatprep.subr.bf16.mxu0 0
    %356 = vmatpush1.bf16.msra.mxu0 0
    %357 = vmatprep.subr.bf16.mxu0 0
    %358 = vmatpush1.bf16.msra.mxu0 0
    %359 = vmatprep.subr.bf16.mxu0 0
    %360 = vmatpush1.bf16.msra.mxu0 0
    %361 = vmatprep.subr.bf16.mxu0 0
    %362 = vmatpush1.bf16.msra.mxu0 0
    %363 = vmatprep.subr.bf16.mxu0 0
    %364 = vmatpush1.bf16.msra.mxu0 0
    %365 = vmatprep.subr.bf16.mxu0 0
    %366 = vmatpush1.bf16.msra.mxu0 0
    %367 = vmatprep.subr.bf16.mxu0 0
    %368 = vmatpush1.bf16.msra.mxu0 0
    %369 = vmatprep.subr.bf16.mxu0 0
    %370 = vmatpush1.bf16.msra.mxu0 0
    %371 = vmatprep.subr.bf16.mxu0 0
    %372 = vmatpush1.bf16.msra.mxu0 0
    %373 = vmatprep.subr.bf16.mxu0 0
    %374 = vmatpush1.bf16.msra.mxu0 0
    %375 = vmatprep.subr.bf16.mxu0 0
    %376 = vmatpush1.bf16.msra.mxu0 0
    %377 = vmatprep.subr.bf16.mxu0 0
    %378 = vmatpush1.bf16.msra.mxu0 0
    %379 = vmatprep.subr.bf16.mxu0 0
    %380 = vmatpush1.bf16.msra.mxu0 0
    %381 = vmatprep.mubr.bf16.mxu0 0
    %382 = vmatmul.mubr.bf16.gmra.mrb[0].mxu0 %v347
    %v383 = vpop.f32.mrb[0].mxu0
    %v384 = vadd.f32 0.0, %v383
    %v385 = vpop.f32.mrb[0].mxu0
    %v386 = vpop.f32.mrb[0].mxu0
    %v387 = vpop.f32.mrb[0].mxu0
    %388 = vdwg.mxu0
    %v389 = vadd.f32 %v250, %v384
    %v390 = vmul.f32 %v389, 0.5
    %v391 = vtanh.pop %v390
    %v392 = vmul.f32 %v391, 0.5
    %v393 = vadd.f32 %v392, 0.5
    %v394 = vtanh.pop %v389
    %v395 = vmul.f32 %v393, 0.0
    %397 = vrot.lane.b32.xlu0 %v394, 64
    %v398 = vpop.permute.xlu0 %397
    %v400 = vmul.f32 %v393, %v398
    %402 = vrot.lane.b32.xlu0 %v400, 32
    %v403 = vpop.permute.xlu0 %402
    %v405 = vadd.f32 %v395, %v403
    %v406 = vtanh.pop %v405
    %408 = vrot.lane.b32.xlu0 %v406, 64
    %v409 = vpop.permute.xlu0 %408
    %v411 = vmul.f32 %v393, %v409
    %v412 = vpack.c.bf16 %v411, %v411
    %414 = vrot.lane.b32.xlu0 %v412, 32
    %v415 = vpop.permute.xlu0 %414
    %v417 = vsel %vm211, %v415, 0
    %419 = vmatprep.subr.bf16.mxu0 0
    %420 = vmatpush1.bf16.msra.mxu0 %v207
    %421 = vmatprep.subr.bf16.mxu0 0
    %422 = vmatpush1.bf16.msra.mxu0 %v208
    %423 = vmatprep.subr.bf16.mxu0 0
    %424 = vmatpush1.bf16.msra.mxu0 0
    %425 = vmatprep.subr.bf16.mxu0 0
    %426 = vmatpush1.bf16.msra.mxu0 0
    %427 = vmatprep.subr.bf16.mxu0 0
    %428 = vmatpush1.bf16.msra.mxu0 0
    %429 = vmatprep.subr.bf16.mxu0 0
    %430 = vmatpush1.bf16.msra.mxu0 0
    %431 = vmatprep.subr.bf16.mxu0 0
    %432 = vmatpush1.bf16.msra.mxu0 0
    %433 = vmatprep.subr.bf16.mxu0 0
    %434 = vmatpush1.bf16.msra.mxu0 0
    %435 = vmatprep.subr.bf16.mxu0 0
    %436 = vmatpush1.bf16.msra.mxu0 0
    %437 = vmatprep.subr.bf16.mxu0 0
    %438 = vmatpush1.bf16.msra.mxu0 0
    %439 = vmatprep.subr.bf16.mxu0 0
    %440 = vmatpush1.bf16.msra.mxu0 0
    %441 = vmatprep.subr.bf16.mxu0 0
    %442 = vmatpush1.bf16.msra.mxu0 0
    %443 = vmatprep.subr.bf16.mxu0 0
    %444 = vmatpush1.bf16.msra.mxu0 0
    %445 = vmatprep.subr.bf16.mxu0 0
    %446 = vmatpush1.bf16.msra.mxu0 0
    %447 = vmatprep.subr.bf16.mxu0 0
    %448 = vmatpush1.bf16.msra.mxu0 0
    %449 = vmatprep.subr.bf16.mxu0 0
    %450 = vmatpush1.bf16.msra.mxu0 0
    %451 = vmatprep.mubr.bf16.mxu0 0
    %452 = vmatmul.mubr.bf16.gmra.mrb[0].mxu0 %v417
    %v453 = vpop.f32.mrb[0].mxu0
    %v454 = vadd.f32 %v197, %v453
    %v455 = vpop.f32.mrb[0].mxu0
    %v456 = vpop.f32.mrb[0].mxu0
    %v457 = vpop.f32.mrb[0].mxu0
    %458 = vdwg.mxu0
    %459 = vmatprep.subr.bf16.mxu0 0
    %460 = vmatpush1.bf16.msra.mxu0 %v263
    %461 = vmatprep.subr.bf16.mxu0 0
    %462 = vmatpush1.bf16.msra.mxu0 %v264
    %463 = vmatprep.subr.bf16.mxu0 0
    %464 = vmatpush1.bf16.msra.mxu0 0
    %465 = vmatprep.subr.bf16.mxu0 0
    %466 = vmatpush1.bf16.msra.mxu0 0
    %467 = vmatprep.subr.bf16.mxu0 0
    %468 = vmatpush1.bf16.msra.mxu0 0
    %469 = vmatprep.subr.bf16.mxu0 0
    %470 = vmatpush1.bf16.msra.mxu0 0
    %471 = vmatprep.subr.bf16.mxu0 0
    %472 = vmatpush1.bf16.msra.mxu0 0
    %473 = vmatprep.subr.bf16.mxu0 0
    %474 = vmatpush1.bf16.msra.mxu0 0
    %475 = vmatprep.subr.bf16.mxu0 0
    %476 = vmatpush1.bf16.msra.mxu0 0
    %477 = vmatprep.subr.bf16.mxu0 0
    %478 = vmatpush1.bf16.msra.mxu0 0
    %479 = vmatprep.subr.bf16.mxu0 0
    %480 = vmatpush1.bf16.msra.mxu0 0
    %481 = vmatprep.subr.bf16.mxu0 0
    %482 = vmatpush1.bf16.msra.mxu0 0
    %483 = vmatprep.subr.bf16.mxu0 0
    %484 = vmatpush1.bf16.msra.mxu0 0
    %485 = vmatprep.subr.bf16.mxu0 0
    %486 = vmatpush1.bf16.msra.mxu0 0
    %487 = vmatprep.subr.bf16.mxu0 0
    %488 = vmatpush1.bf16.msra.mxu0 0
    %489 = vmatprep.subr.bf16.mxu0 0
    %490 = vmatpush1.bf16.msra.mxu0 0
    %491 = vmatprep.mubr.bf16.mxu0 0
    %492 = vmatmul.mubr.bf16.gmra.mrb[0].mxu0 %v347
    %v493 = vpop.f32.mrb[0].mxu0
    %v494 = vadd.f32 0.0, %v493
    %v495 = vpop.f32.mrb[0].mxu0
    %v496 = vpop.f32.mrb[0].mxu0
    %v497 = vpop.f32.mrb[0].mxu0
    %498 = vdwg.mxu0
    %v499 = vadd.f32 %v147, %v494
    %v500 = vmul.f32 %v499, 0.5
    %v501 = vtanh.pop %v500
    %v502 = vmul.f32 %v501, 0.5
    %v503 = vadd.f32 %v502, 0.5
    %v504 = vtanh.pop %v499
    %v505 = vmul.f32 %v503, %v323
    %507 = vrot.lane.b32.xlu0 %v504, 64
    %v508 = vpop.permute.xlu0 %507
    %v510 = vmul.f32 %v503, %v508
    %512 = vrot.lane.b32.xlu0 %v510, 32
    %v513 = vpop.permute.xlu0 %512
    %v515 = vadd.f32 %v505, %v513
    %v516 = vtanh.pop %v515
    %518 = vrot.lane.b32.xlu0 %v516, 64
    %v519 = vpop.permute.xlu0 %518
    %v521 = vmul.f32 %v503, %v519
    %v522 = vpack.c.bf16 %v521, %v521
    %524 = vrot.lane.b32.xlu0 %v522, 32
    %v525 = vpop.permute.xlu0 %524
    %v527 = vsel %vm211, %v525, 0
    %529 = vmatprep.subr.bf16.mxu0 0
    %530 = vmatpush1.bf16.msra.mxu0 %v342
    %531 = vmatprep.subr.bf16.mxu0 0
    %532 = vmatpush1.bf16.msra.mxu0 %v343
    %533 = vmatprep.subr.bf16.mxu0 0
    %534 = vmatpush1.bf16.msra.mxu0 0
    %535 = vmatprep.subr.bf16.mxu0 0
    %536 = vmatpush1.bf16.msra.mxu0 0
    %537 = vmatprep.subr.bf16.mxu0 0
    %538 = vmatpush1.bf16.msra.mxu0 0
    %539 = vmatprep.subr.bf16.mxu0 0
    %540 = vmatpush1.bf16.msra.mxu0 0
    %541 = vmatprep.subr.bf16.mxu0 0
    %542 = vmatpush1.bf16.msra.mxu0 0
    %543 = vmatprep.subr.bf16.mxu0 0
    %544 = vmatpush1.bf16.msra.mxu0 0
    %545 = vmatprep.subr.bf16.mxu0 0
    %546 = vmatpush1.bf16.msra.mxu0 0
    %547 = vmatprep.subr.bf16.mxu0 0
    %548 = vmatpush1.bf16.msra.mxu0 0
    %549 = vmatprep.subr.bf16.mxu0 0
    %550 = vmatpush1.bf16.msra.mxu0 0
    %551 = vmatprep.subr.bf16.mxu0 0
    %552 = vmatpush1.bf16.msra.mxu0 0
    %553 = vmatprep.subr.bf16.mxu0 0
    %554 = vmatpush1.bf16.msra.mxu0 0
    %555 = vmatprep.subr.bf16.mxu0 0
    %556 = vmatpush1.bf16.msra.mxu0 0
    %557 = vmatprep.subr.bf16.mxu0 0
    %558 = vmatpush1.bf16.msra.mxu0 0
    %559 = vmatprep.subr.bf16.mxu0 0
    %560 = vmatpush1.bf16.msra.mxu0 0
    %561 = vmatprep.mubr.bf16.mxu0 0
    %562 = vmatmul.mubr.bf16.gmra.mrb[0].mxu0 %v527
    %v563 = vpop.f32.mrb[0].mxu0
    %v564 = vadd.f32 0.0, %v563
    %v565 = vpop.f32.mrb[0].mxu0
    %v566 = vpop.f32.mrb[0].mxu0
    %v567 = vpop.f32.mrb[0].mxu0
    %568 = vdwg.mxu0
    %v569 = vadd.f32 %v454, %v564
    %v570 = vmul.f32 %v569, 0.5
    %v571 = vtanh.pop %v570
    %v572 = vmul.f32 %v571, 0.5
    %v573 = vadd.f32 %v572, 0.5
    %v574 = vtanh.pop %v569
    %v575 = vmul.f32 %v573, %v405
    %577 = vrot.lane.b32.xlu0 %v574, 64
    %v578 = vpop.permute.xlu0 %577
    %v580 = vmul.f32 %v573, %v578
    %582 = vrot.lane.b32.xlu0 %v580, 32
    %v583 = vpop.permute.xlu0 %582
    %v585 = vadd.f32 %v575, %v583
    %v586 = vtanh.pop %v585
    %588 = vrot.lane.b32.xlu0 %v586, 64
    %v589 = vpop.permute.xlu0 %588
    %v591 = vmul.f32 %v573, %v589
    %v592 = vpack.c.bf16 %v591, %v591
    %594 = vrot.lane.b32.xlu0 %v592, 32
    %v595 = vpop.permute.xlu0 %594
    %v597 = vsel %vm211, %v595, 0
    %599 = vmatprep.subr.bf16.mxu0 0
    %600 = vmatpush1.bf16.msra.mxu0 %v207
    %601 = vmatprep.subr.bf16.mxu0 0
    %602 = vmatpush1.bf16.msra.mxu0 %v208
    %603 = vmatprep.subr.bf16.mxu0 0
    %604 = vmatpush1.bf16.msra.mxu0 0
    %605 = vmatprep.subr.bf16.mxu0 0
    %606 = vmatpush1.bf16.msra.mxu0 0
    %607 = vmatprep.subr.bf16.mxu0 0
    %608 = vmatpush1.bf16.msra.mxu0 0
    %609 = vmatprep.subr.bf16.mxu0 0
    %610 = vmatpush1.bf16.msra.mxu0 0
    %611 = vmatprep.subr.bf16.mxu0 0
    %612 = vmatpush1.bf16.msra.mxu0 0
    %613 = vmatprep.subr.bf16.mxu0 0
    %614 = vmatpush1.bf16.msra.mxu0 0
    %615 = vmatprep.subr.bf16.mxu0 0
    %616 = vmatpush1.bf16.msra.mxu0 0
    %617 = vmatprep.subr.bf16.mxu0 0
    %618 = vmatpush1.bf16.msra.mxu0 0
    %619 = vmatprep.subr.bf16.mxu0 0
    %620 = vmatpush1.bf16.msra.mxu0 0
    %621 = vmatprep.subr.bf16.mxu0 0
    %622 = vmatpush1.bf16.msra.mxu0 0
    %623 = vmatprep.subr.bf16.mxu0 0
    %624 = vmatpush1.bf16.msra.mxu0 0
    %625 = vmatprep.subr.bf16.mxu0 0
    %626 = vmatpush1.bf16.msra.mxu0 0
    %627 = vmatprep.subr.bf16.mxu0 0
    %628 = vmatpush1.bf16.msra.mxu0 0
    %629 = vmatprep.subr.bf16.mxu0 0
    %630 = vmatpush1.bf16.msra.mxu0 0
    %631 = vmatprep.mubr.bf16.mxu0 0
    %632 = vmatmul.mubr.bf16.gmra.mrb[0].mxu0 %v597
    %v633 = vpop.f32.mrb[0].mxu0
    %v634 = vadd.f32 %v197, %v633
    %v635 = vpop.f32.mrb[0].mxu0
    %v636 = vpop.f32.mrb[0].mxu0
    %v637 = vpop.f32.mrb[0].mxu0
    %638 = vdwg.mxu0
    %639 = vmatprep.subr.bf16.mxu0 0
    %640 = vmatpush1.bf16.msra.mxu0 %v263
    %641 = vmatprep.subr.bf16.mxu0 0
    %642 = vmatpush1.bf16.msra.mxu0 %v264
    %643 = vmatprep.subr.bf16.mxu0 0
    %644 = vmatpush1.bf16.msra.mxu0 0
    %645 = vmatprep.subr.bf16.mxu0 0
    %646 = vmatpush1.bf16.msra.mxu0 0
    %647 = vmatprep.subr.bf16.mxu0 0
    %648 = vmatpush1.bf16.msra.mxu0 0
    %649 = vmatprep.subr.bf16.mxu0 0
    %650 = vmatpush1.bf16.msra.mxu0 0
    %651 = vmatprep.subr.bf16.mxu0 0
    %652 = vmatpush1.bf16.msra.mxu0 0
    %653 = vmatprep.subr.bf16.mxu0 0
    %654 = vmatpush1.bf16.msra.mxu0 0
    %655 = vmatprep.subr.bf16.mxu0 0
    %656 = vmatpush1.bf16.msra.mxu0 0
    %657 = vmatprep.subr.bf16.mxu0 0
    %658 = vmatpush1.bf16.msra.mxu0 0
    %659 = vmatprep.subr.bf16.mxu0 0
    %660 = vmatpush1.bf16.msra.mxu0 0
    %661 = vmatprep.subr.bf16.mxu0 0
    %662 = vmatpush1.bf16.msra.mxu0 0
    %663 = vmatprep.subr.bf16.mxu0 0
    %664 = vmatpush1.bf16.msra.mxu0 0
    %665 = vmatprep.subr.bf16.mxu0 0
    %666 = vmatpush1.bf16.msra.mxu0 0
    %667 = vmatprep.subr.bf16.mxu0 0
    %668 = vmatpush1.bf16.msra.mxu0 0
    %669 = vmatprep.subr.bf16.mxu0 0
    %670 = vmatpush1.bf16.msra.mxu0 0
    %671 = vmatprep.mubr.bf16.mxu0 0
    %672 = vmatmul.mubr.bf16.gmra.mrb[0].mxu0 %v527
    %v673 = vpop.f32.mrb[0].mxu0
    %v674 = vadd.f32 0.0, %v673
    %v675 = vpop.f32.mrb[0].mxu0
    %v676 = vpop.f32.mrb[0].mxu0
    %v677 = vpop.f32.mrb[0].mxu0
    %678 = vdwg.mxu0
    %v679 = vadd.f32 %v152, %v674
    %v680 = vmul.f32 %v679, 0.5
    %v681 = vtanh.pop %v680
    %v682 = vmul.f32 %v681, 0.5
    %v683 = vadd.f32 %v682, 0.5
    %v684 = vtanh.pop %v679
    %v685 = vmul.f32 %v683, %v515
    %687 = vrot.lane.b32.xlu0 %v684, 64
    %v688 = vpop.permute.xlu0 %687
    %v690 = vmul.f32 %v683, %v688
    %692 = vrot.lane.b32.xlu0 %v690, 32
    %v693 = vpop.permute.xlu0 %692
    %v695 = vadd.f32 %v685, %v693
    %v696 = vtanh.pop %v695
    %698 = vrot.lane.b32.xlu0 %v696, 64
    %v699 = vpop.permute.xlu0 %698
    %v701 = vmul.f32 %v683, %v699
    %v702 = vpack.c.bf16 %v701, %v701
    %704 = vrot.lane.b32.xlu0 %v702, 32
    %v705 = vpop.permute.xlu0 %704
    %v707 = vsel %vm211, %v705, 0
    %709 = vmatprep.subr.bf16.mxu0 0
    %710 = vmatpush1.bf16.msra.mxu0 %v342
    %711 = vmatprep.subr.bf16.mxu0 0
    %712 = vmatpush1.bf16.msra.mxu0 %v343
    %713 = vmatprep.subr.bf16.mxu0 0
    %714 = vmatpush1.bf16.msra.mxu0 0
    %715 = vmatprep.subr.bf16.mxu0 0
    %716 = vmatpush1.bf16.msra.mxu0 0
    %717 = vmatprep.subr.bf16.mxu0 0
    %718 = vmatpush1.bf16.msra.mxu0 0
    %719 = vmatprep.subr.bf16.mxu0 0
    %720 = vmatpush1.bf16.msra.mxu0 0
    %721 = vmatprep.subr.bf16.mxu0 0
    %722 = vmatpush1.bf16.msra.mxu0 0
    %723 = vmatprep.subr.bf16.mxu0 0
    %724 = vmatpush1.bf16.msra.mxu0 0
    %725 = vmatprep.subr.bf16.mxu0 0
    %726 = vmatpush1.bf16.msra.mxu0 0
    %727 = vmatprep.subr.bf16.mxu0 0
    %728 = vmatpush1.bf16.msra.mxu0 0
    %729 = vmatprep.subr.bf16.mxu0 0
    %730 = vmatpush1.bf16.msra.mxu0 0
    %731 = vmatprep.subr.bf16.mxu0 0
    %732 = vmatpush1.bf16.msra.mxu0 0
    %733 = vmatprep.subr.bf16.mxu0 0
    %734 = vmatpush1.bf16.msra.mxu0 0
    %735 = vmatprep.subr.bf16.mxu0 0
    %736 = vmatpush1.bf16.msra.mxu0 0
    %737 = vmatprep.subr.bf16.mxu0 0
    %738 = vmatpush1.bf16.msra.mxu0 0
    %739 = vmatprep.subr.bf16.mxu0 0
    %740 = vmatpush1.bf16.msra.mxu0 0
    %741 = vmatprep.mubr.bf16.mxu0 0
    %742 = vmatmul.mubr.bf16.gmra.mrb[0].mxu0 %v707
    %v743 = vpop.f32.mrb[0].mxu0
    %v744 = vadd.f32 0.0, %v743
    %v745 = vpop.f32.mrb[0].mxu0
    %v746 = vpop.f32.mrb[0].mxu0
    %v747 = vpop.f32.mrb[0].mxu0
    %748 = vdwg.mxu0
    %v749 = vadd.f32 %v634, %v744
    %v750 = vmul.f32 %v749, 0.5
    %v751 = vtanh.pop %v750
    %v752 = vmul.f32 %v751, 0.5
    %v753 = vadd.f32 %v752, 0.5
    %v754 = vtanh.pop %v749
    %v755 = vmul.f32 %v753, %v585
    %757 = vrot.lane.b32.xlu0 %v754, 64
    %v758 = vpop.permute.xlu0 %757
    %v760 = vmul.f32 %v753, %v758
    %762 = vrot.lane.b32.xlu0 %v760, 32
    %v763 = vpop.permute.xlu0 %762
    %v765 = vadd.f32 %v755, %v763
    %v766 = vtanh.pop %v765
    %768 = vrot.lane.b32.xlu0 %v766, 64
    %v769 = vpop.permute.xlu0 %768
    %v771 = vmul.f32 %v753, %v769
    %v772 = vpack.c.bf16 %v771, %v771
    %774 = vrot.lane.b32.xlu0 %v772, 32
    %v775 = vpop.permute.xlu0 %774
    %v777 = vsel %vm211, %v775, 0
    %779 = vmatprep.subr.bf16.mxu0 0
    %780 = vmatpush1.bf16.msra.mxu0 %v207
    %781 = vmatprep.subr.bf16.mxu0 0
    %782 = vmatpush1.bf16.msra.mxu0 %v208
    %783 = vmatprep.subr.bf16.mxu0 0
    %784 = vmatpush1.bf16.msra.mxu0 0
    %785 = vmatprep.subr.bf16.mxu0 0
    %786 = vmatpush1.bf16.msra.mxu0 0
    %787 = vmatprep.subr.bf16.mxu0 0
    %788 = vmatpush1.bf16.msra.mxu0 0
    %789 = vmatprep.subr.bf16.mxu0 0
    %790 = vmatpush1.bf16.msra.mxu0 0
    %791 = vmatprep.subr.bf16.mxu0 0
    %792 = vmatpush1.bf16.msra.mxu0 0
    %793 = vmatprep.subr.bf16.mxu0 0
    %794 = vmatpush1.bf16.msra.mxu0 0
    %795 = vmatprep.subr.bf16.mxu0 0
    %796 = vmatpush1.bf16.msra.mxu0 0
    %797 = vmatprep.subr.bf16.mxu0 0
    %798 = vmatpush1.bf16.msra.mxu0 0
    %799 = vmatprep.subr.bf16.mxu0 0
    %800 = vmatpush1.bf16.msra.mxu0 0
    %801 = vmatprep.subr.bf16.mxu0 0
    %802 = vmatpush1.bf16.msra.mxu0 0
    %803 = vmatprep.subr.bf16.mxu0 0
    %804 = vmatpush1.bf16.msra.mxu0 0
    %805 = vmatprep.subr.bf16.mxu0 0
    %806 = vmatpush1.bf16.msra.mxu0 0
    %807 = vmatprep.subr.bf16.mxu0 0
    %808 = vmatpush1.bf16.msra.mxu0 0
    %809 = vmatprep.subr.bf16.mxu0 0
    %810 = vmatpush1.bf16.msra.mxu0 0
    %811 = vmatprep.mubr.bf16.mxu0 0
    %812 = vmatmul.mubr.bf16.gmra.mrb[0].mxu0 %v777
    %v813 = vpop.f32.mrb[0].mxu0
    %v814 = vadd.f32 %v197, %v813
    %v815 = vpop.f32.mrb[0].mxu0
    %v816 = vpop.f32.mrb[0].mxu0
    %v817 = vpop.f32.mrb[0].mxu0
    %818 = vdwg.mxu0
    %819 = vmatprep.subr.bf16.mxu0 0
    %820 = vmatpush1.bf16.msra.mxu0 %v263
    %821 = vmatprep.subr.bf16.mxu0 0
    %822 = vmatpush1.bf16.msra.mxu0 %v264
    %823 = vmatprep.subr.bf16.mxu0 0
    %824 = vmatpush1.bf16.msra.mxu0 0
    %825 = vmatprep.subr.bf16.mxu0 0
    %826 = vmatpush1.bf16.msra.mxu0 0
    %827 = vmatprep.subr.bf16.mxu0 0
    %828 = vmatpush1.bf16.msra.mxu0 0
    %829 = vmatprep.subr.bf16.mxu0 0
    %830 = vmatpush1.bf16.msra.mxu0 0
    %831 = vmatprep.subr.bf16.mxu0 0
    %832 = vmatpush1.bf16.msra.mxu0 0
    %833 = vmatprep.subr.bf16.mxu0 0
    %834 = vmatpush1.bf16.msra.mxu0 0
    %835 = vmatprep.subr.bf16.mxu0 0
    %836 = vmatpush1.bf16.msra.mxu0 0
    %837 = vmatprep.subr.bf16.mxu0 0
    %838 = vmatpush1.bf16.msra.mxu0 0
    %839 = vmatprep.subr.bf16.mxu0 0
    %840 = vmatpush1.bf16.msra.mxu0 0
    %841 = vmatprep.subr.bf16.mxu0 0
    %842 = vmatpush1.bf16.msra.mxu0 0
    %843 = vmatprep.subr.bf16.mxu0 0
    %844 = vmatpush1.bf16.msra.mxu0 0
    %845 = vmatprep.subr.bf16.mxu0 0
    %846 = vmatpush1.bf16.msra.mxu0 0
    %847 = vmatprep.subr.bf16.mxu0 0
    %848 = vmatpush1.bf16.msra.mxu0 0
    %849 = vmatprep.subr.bf16.mxu0 0
    %850 = vmatpush1.bf16.msra.mxu0 0
    %851 = vmatprep.mubr.bf16.mxu0 0
    %852 = vmatmul.mubr.bf16.gmra.mrb[0].mxu0 %v707
    %v853 = vpop.f32.mrb[0].mxu0
    %v854 = vadd.f32 0.0, %v853
    %v855 = vpop.f32.mrb[0].mxu0
    %v856 = vpop.f32.mrb[0].mxu0
    %v857 = vpop.f32.mrb[0].mxu0
    %858 = vdwg.mxu0
    %v859 = vadd.f32 %v157, %v854
    %v860 = vmul.f32 %v859, 0.5
    %v861 = vtanh.pop %v860
    %v862 = vmul.f32 %v861, 0.5
    %v863 = vadd.f32 %v862, 0.5
    %v864 = vtanh.pop %v859
    %v865 = vmul.f32 %v863, %v695
    %867 = vrot.lane.b32.xlu0 %v864, 64
    %v868 = vpop.permute.xlu0 %867
    %v870 = vmul.f32 %v863, %v868
    %872 = vrot.lane.b32.xlu0 %v870, 32
    %v873 = vpop.permute.xlu0 %872
    %v875 = vadd.f32 %v865, %v873
    %v876 = vtanh.pop %v875
    %878 = vrot.lane.b32.xlu0 %v876, 64
    %v879 = vpop.permute.xlu0 %878
    %v881 = vmul.f32 %v863, %v879
    %v882 = vpack.c.bf16 %v881, %v881
    %884 = vrot.lane.b32.xlu0 %v882, 32
    %v885 = vpop.permute.xlu0 %884
    %v887 = vsel %vm211, %v885, 0
    %889 = vmatprep.subr.bf16.mxu0 0
    %890 = vmatpush1.bf16.msra.mxu0 %v342
    %891 = vmatprep.subr.bf16.mxu0 0
    %892 = vmatpush1.bf16.msra.mxu0 %v343
    %893 = vmatprep.subr.bf16.mxu0 0
    %894 = vmatpush1.bf16.msra.mxu0 0
    %895 = vmatprep.subr.bf16.mxu0 0
    %896 = vmatpush1.bf16.msra.mxu0 0
    %897 = vmatprep.subr.bf16.mxu0 0
    %898 = vmatpush1.bf16.msra.mxu0 0
    %899 = vmatprep.subr.bf16.mxu0 0
    %900 = vmatpush1.bf16.msra.mxu0 0
    %901 = vmatprep.subr.bf16.mxu0 0
    %902 = vmatpush1.bf16.msra.mxu0 0
    %903 = vmatprep.subr.bf16.mxu0 0
    %904 = vmatpush1.bf16.msra.mxu0 0
    %905 = vmatprep.subr.bf16.mxu0 0
    %906 = vmatpush1.bf16.msra.mxu0 0
    %907 = vmatprep.subr.bf16.mxu0 0
    %908 = vmatpush1.bf16.msra.mxu0 0
    %909 = vmatprep.subr.bf16.mxu0 0
    %910 = vmatpush1.bf16.msra.mxu0 0
    %911 = vmatprep.subr.bf16.mxu0 0
    %912 = vmatpush1.bf16.msra.mxu0 0
    %913 = vmatprep.subr.bf16.mxu0 0
    %914 = vmatpush1.bf16.msra.mxu0 0
    %915 = vmatprep.subr.bf16.mxu0 0
    %916 = vmatpush1.bf16.msra.mxu0 0
    %917 = vmatprep.subr.bf16.mxu0 0
    %918 = vmatpush1.bf16.msra.mxu0 0
    %919 = vmatprep.subr.bf16.mxu0 0
    %920 = vmatpush1.bf16.msra.mxu0 0
    %921 = vmatprep.mubr.bf16.mxu0 0
    %922 = vmatmul.mubr.bf16.gmra.mrb[0].mxu0 %v887
    %v923 = vpop.f32.mrb[0].mxu0
    %v924 = vadd.f32 0.0, %v923
    %v925 = vpop.f32.mrb[0].mxu0
    %v926 = vpop.f32.mrb[0].mxu0
    %v927 = vpop.f32.mrb[0].mxu0
    %928 = vdwg.mxu0
    %v929 = vadd.f32 %v814, %v924
    %v930 = vmul.f32 %v929, 0.5
    %v931 = vtanh.pop %v930
    %v932 = vmul.f32 %v931, 0.5
    %v933 = vadd.f32 %v932, 0.5
    %v934 = vtanh.pop %v929
    %v935 = vmul.f32 %v933, %v765
    %937 = vrot.lane.b32.xlu0 %v934, 64
    %v938 = vpop.permute.xlu0 %937
    %v940 = vmul.f32 %v933, %v938
    %942 = vrot.lane.b32.xlu0 %v940, 32
    %v943 = vpop.permute.xlu0 %942
    %v945 = vadd.f32 %v935, %v943
    %v946 = vtanh.pop %v945
    %948 = vrot.lane.b32.xlu0 %v946, 64
    %v949 = vpop.permute.xlu0 %948
    %v951 = vmul.f32 %v933, %v949
    %v952 = vpack.c.bf16 %v951, %v951
    %954 = vrot.lane.b32.xlu0 %v952, 32
    %v955 = vpop.permute.xlu0 %954
    %v957 = vsel %vm211, %v955, 0
    %959 = vmatprep.subr.bf16.mxu0 0
    %960 = vmatpush1.bf16.msra.mxu0 %v207
    %961 = vmatprep.subr.bf16.mxu0 0
    %962 = vmatpush1.bf16.msra.mxu0 %v208
    %963 = vmatprep.subr.bf16.mxu0 0
    %964 = vmatpush1.bf16.msra.mxu0 0
    %965 = vmatprep.subr.bf16.mxu0 0
    %966 = vmatpush1.bf16.msra.mxu0 0
    %967 = vmatprep.subr.bf16.mxu0 0
    %968 = vmatpush1.bf16.msra.mxu0 0
    %969 = vmatprep.subr.bf16.mxu0 0
    %970 = vmatpush1.bf16.msra.mxu0 0
    %971 = vmatprep.subr.bf16.mxu0 0
    %972 = vmatpush1.bf16.msra.mxu0 0
    %973 = vmatprep.subr.bf16.mxu0 0
    %974 = vmatpush1.bf16.msra.mxu0 0
    %975 = vmatprep.subr.bf16.mxu0 0
    %976 = vmatpush1.bf16.msra.mxu0 0
    %977 = vmatprep.subr.bf16.mxu0 0
    %978 = vmatpush1.bf16.msra.mxu0 0
    %979 = vmatprep.subr.bf16.mxu0 0
    %980 = vmatpush1.bf16.msra.mxu0 0
    %981 = vmatprep.subr.bf16.mxu0 0
    %982 = vmatpush1.bf16.msra.mxu0 0
    %983 = vmatprep.subr.bf16.mxu0 0
    %984 = vmatpush1.bf16.msra.mxu0 0
    %985 = vmatprep.subr.bf16.mxu0 0
    %986 = vmatpush1.bf16.msra.mxu0 0
    %987 = vmatprep.subr.bf16.mxu0 0
    %988 = vmatpush1.bf16.msra.mxu0 0
    %989 = vmatprep.subr.bf16.mxu0 0
    %990 = vmatpush1.bf16.msra.mxu0 0
    %991 = vmatprep.mubr.bf16.mxu0 0
    %992 = vmatmul.mubr.bf16.gmra.mrb[0].mxu0 %v957
    %v993 = vpop.f32.mrb[0].mxu0
    %v994 = vadd.f32 %v197, %v993
    %v995 = vpop.f32.mrb[0].mxu0
    %v996 = vpop.f32.mrb[0].mxu0
    %v997 = vpop.f32.mrb[0].mxu0
    %998 = vdwg.mxu0
    %999 = vmatprep.subr.bf16.mxu0 0
    %1000 = vmatpush1.bf16.msra.mxu0 %v263
    %1001 = vmatprep.subr.bf16.mxu0 0
    %1002 = vmatpush1.bf16.msra.mxu0 %v264
    %1003 = vmatprep.subr.bf16.mxu0 0
    %1004 = vmatpush1.bf16.msra.mxu0 0
    %1005 = vmatprep.subr.bf16.mxu0 0
    %1006 = vmatpush1.bf16.msra.mxu0 0
    %1007 = vmatprep.subr.bf16.mxu0 0
    %1008 = vmatpush1.bf16.msra.mxu0 0
    %1009 = vmatprep.subr.bf16.mxu0 0
    %1010 = vmatpush1.bf16.msra.mxu0 0
    %1011 = vmatprep.subr.bf16.mxu0 0
    %1012 = vmatpush1.bf16.msra.mxu0 0
    %1013 = vmatprep.subr.bf16.mxu0 0
    %1014 = vmatpush1.bf16.msra.mxu0 0
    %1015 = vmatprep.subr.bf16.mxu0 0
    %1016 = vmatpush1.bf16.msra.mxu0 0
    %1017 = vmatprep.subr.bf16.mxu0 0
    %1018 = vmatpush1.bf16.msra.mxu0 0
    %1019 = vmatprep.subr.bf16.mxu0 0
    %1020 = vmatpush1.bf16.msra.mxu0 0
    %1021 = vmatprep.subr.bf16.mxu0 0
    %1022 = vmatpush1.bf16.msra.mxu0 0
    %1023 = vmatprep.subr.bf16.mxu0 0
    %1024 = vmatpush1.bf16.msra.mxu0 0
    %1025 = vmatprep.subr.bf16.mxu0 0
    %1026 = vmatpush1.bf16.msra.mxu0 0
    %1027 = vmatprep.subr.bf16.mxu0 0
    %1028 = vmatpush1.bf16.msra.mxu0 0
    %1029 = vmatprep.subr.bf16.mxu0 0
    %1030 = vmatpush1.bf16.msra.mxu0 0
    %1031 = vmatprep.mubr.bf16.mxu0 0
    %1032 = vmatmul.mubr.bf16.gmra.mrb[0].mxu0 %v887
    %v1033 = vpop.f32.mrb[0].mxu0
    %v1034 = vadd.f32 0.0, %v1033
    %v1035 = vpop.f32.mrb[0].mxu0
    %v1036 = vpop.f32.mrb[0].mxu0
    %v1037 = vpop.f32.mrb[0].mxu0
    %1038 = vdwg.mxu0
    %v1039 = vadd.f32 %v162, %v1034
    %v1040 = vmul.f32 %v1039, 0.5
    %v1041 = vtanh.pop %v1040
    %v1042 = vmul.f32 %v1041, 0.5
    %v1043 = vadd.f32 %v1042, 0.5
    %v1044 = vtanh.pop %v1039
    %v1045 = vmul.f32 %v1043, %v875
    %1047 = vrot.lane.b32.xlu0 %v1044, 64
    %v1048 = vpop.permute.xlu0 %1047
    %v1050 = vmul.f32 %v1043, %v1048
    %1052 = vrot.lane.b32.xlu0 %v1050, 32
    %v1053 = vpop.permute.xlu0 %1052
    %v1055 = vadd.f32 %v1045, %v1053
    %v1056 = vtanh.pop %v1055
    %1058 = vrot.lane.b32.xlu0 %v1056, 64
    %v1059 = vpop.permute.xlu0 %1058
    %v1061 = vmul.f32 %v1043, %v1059
    %v1062 = vpack.c.bf16 %v1061, %v1061
    %1064 = vrot.lane.b32.xlu0 %v1062, 32
    %v1065 = vpop.permute.xlu0 %1064
    %v1067 = vsel %vm211, %v1065, 0
    %1069 = vmatprep.subr.bf16.mxu0 0
    %1070 = vmatpush1.bf16.msra.mxu0 %v342
    %1071 = vmatprep.subr.bf16.mxu0 0
    %1072 = vmatpush1.bf16.msra.mxu0 %v343
    %1073 = vmatprep.subr.bf16.mxu0 0
    %1074 = vmatpush1.bf16.msra.mxu0 0
    %1075 = vmatprep.subr.bf16.mxu0 0
    %1076 = vmatpush1.bf16.msra.mxu0 0
    %1077 = vmatprep.subr.bf16.mxu0 0
    %1078 = vmatpush1.bf16.msra.mxu0 0
    %1079 = vmatprep.subr.bf16.mxu0 0
    %1080 = vmatpush1.bf16.msra.mxu0 0
    %1081 = vmatprep.subr.bf16.mxu0 0
    %1082 = vmatpush1.bf16.msra.mxu0 0
    %1083 = vmatprep.subr.bf16.mxu0 0
    %1084 = vmatpush1.bf16.msra.mxu0 0
    %1085 = vmatprep.subr.bf16.mxu0 0
    %1086 = vmatpush1.bf16.msra.mxu0 0
    %1087 = vmatprep.subr.bf16.mxu0 0
    %1088 = vmatpush1.bf16.msra.mxu0 0
    %1089 = vmatprep.subr.bf16.mxu0 0
    %1090 = vmatpush1.bf16.msra.mxu0 0
    %1091 = vmatprep.subr.bf16.mxu0 0
    %1092 = vmatpush1.bf16.msra.mxu0 0
    %1093 = vmatprep.subr.bf16.mxu0 0
    %1094 = vmatpush1.bf16.msra.mxu0 0
    %1095 = vmatprep.subr.bf16.mxu0 0
    %1096 = vmatpush1.bf16.msra.mxu0 0
    %1097 = vmatprep.subr.bf16.mxu0 0
    %1098 = vmatpush1.bf16.msra.mxu0 0
    %1099 = vmatprep.subr.bf16.mxu0 0
    %1100 = vmatpush1.bf16.msra.mxu0 0
    %1101 = vmatprep.mubr.bf16.mxu0 0
    %1102 = vmatmul.mubr.bf16.gmra.mrb[0].mxu0 %v1067
    %v1103 = vpop.f32.mrb[0].mxu0
    %v1104 = vadd.f32 0.0, %v1103
    %v1105 = vpop.f32.mrb[0].mxu0
    %v1106 = vpop.f32.mrb[0].mxu0
    %v1107 = vpop.f32.mrb[0].mxu0
    %1108 = vdwg.mxu0
    %v1109 = vadd.f32 %v994, %v1104
    %v1110 = vmul.f32 %v1109, 0.5
    %v1111 = vtanh.pop %v1110
    %v1112 = vmul.f32 %v1111, 0.5
    %v1113 = vadd.f32 %v1112, 0.5
    %v1114 = vtanh.pop %v1109
    %v1115 = vmul.f32 %v1113, %v945
    %1117 = vrot.lane.b32.xlu0 %v1114, 64
    %v1118 = vpop.permute.xlu0 %1117
    %v1120 = vmul.f32 %v1113, %v1118
    %1122 = vrot.lane.b32.xlu0 %v1120, 32
    %v1123 = vpop.permute.xlu0 %1122
    %v1125 = vadd.f32 %v1115, %v1123
    %v1126 = vtanh.pop %v1125
    %1128 = vrot.lane.b32.xlu0 %v1126, 64
    %v1129 = vpop.permute.xlu0 %1128
    %v1131 = vmul.f32 %v1113, %v1129
    %v1132 = vpack.c.bf16 %v1131, %v1131
    %1134 = vrot.lane.b32.xlu0 %v1132, 32
    %v1135 = vpop.permute.xlu0 %1134
    %v1137 = vsel %vm211, %v1135, 0
    %1139 = vmatprep.subr.bf16.mxu0 0
    %1140 = vmatpush1.bf16.msra.mxu0 %v207
    %1141 = vmatprep.subr.bf16.mxu0 0
    %1142 = vmatpush1.bf16.msra.mxu0 %v208
    %1143 = vmatprep.subr.bf16.mxu0 0
    %1144 = vmatpush1.bf16.msra.mxu0 0
    %1145 = vmatprep.subr.bf16.mxu0 0
    %1146 = vmatpush1.bf16.msra.mxu0 0
    %1147 = vmatprep.subr.bf16.mxu0 0
    %1148 = vmatpush1.bf16.msra.mxu0 0
    %1149 = vmatprep.subr.bf16.mxu0 0
    %1150 = vmatpush1.bf16.msra.mxu0 0
    %1151 = vmatprep.subr.bf16.mxu0 0
    %1152 = vmatpush1.bf16.msra.mxu0 0
    %1153 = vmatprep.subr.bf16.mxu0 0
    %1154 = vmatpush1.bf16.msra.mxu0 0
    %1155 = vmatprep.subr.bf16.mxu0 0
    %1156 = vmatpush1.bf16.msra.mxu0 0
    %1157 = vmatprep.subr.bf16.mxu0 0
    %1158 = vmatpush1.bf16.msra.mxu0 0
    %1159 = vmatprep.subr.bf16.mxu0 0
    %1160 = vmatpush1.bf16.msra.mxu0 0
    %1161 = vmatprep.subr.bf16.mxu0 0
    %1162 = vmatpush1.bf16.msra.mxu0 0
    %1163 = vmatprep.subr.bf16.mxu0 0
    %1164 = vmatpush1.bf16.msra.mxu0 0
    %1165 = vmatprep.subr.bf16.mxu0 0
    %1166 = vmatpush1.bf16.msra.mxu0 0
    %1167 = vmatprep.subr.bf16.mxu0 0
    %1168 = vmatpush1.bf16.msra.mxu0 0
    %1169 = vmatprep.subr.bf16.mxu0 0
    %1170 = vmatpush1.bf16.msra.mxu0 0
    %1171 = vmatprep.mubr.bf16.mxu0 0
    %1172 = vmatmul.mubr.bf16.gmra.mrb[0].mxu0 %v1137
    %v1173 = vpop.f32.mrb[0].mxu0
    %v1174 = vadd.f32 %v197, %v1173
    %v1175 = vpop.f32.mrb[0].mxu0
    %v1176 = vpop.f32.mrb[0].mxu0
    %v1177 = vpop.f32.mrb[0].mxu0
    %1178 = vdwg.mxu0
    %1179 = vmatprep.subr.bf16.mxu0 0
    %1180 = vmatpush1.bf16.msra.mxu0 %v263
    %1181 = vmatprep.subr.bf16.mxu0 0
    %1182 = vmatpush1.bf16.msra.mxu0 %v264
    %1183 = vmatprep.subr.bf16.mxu0 0
    %1184 = vmatpush1.bf16.msra.mxu0 0
    %1185 = vmatprep.subr.bf16.mxu0 0
    %1186 = vmatpush1.bf16.msra.mxu0 0
    %1187 = vmatprep.subr.bf16.mxu0 0
    %1188 = vmatpush1.bf16.msra.mxu0 0
    %1189 = vmatprep.subr.bf16.mxu0 0
    %1190 = vmatpush1.bf16.msra.mxu0 0
    %1191 = vmatprep.subr.bf16.mxu0 0
    %1192 = vmatpush1.bf16.msra.mxu0 0
    %1193 = vmatprep.subr.bf16.mxu0 0
    %1194 = vmatpush1.bf16.msra.mxu0 0
    %1195 = vmatprep.subr.bf16.mxu0 0
    %1196 = vmatpush1.bf16.msra.mxu0 0
    %1197 = vmatprep.subr.bf16.mxu0 0
    %1198 = vmatpush1.bf16.msra.mxu0 0
    %1199 = vmatprep.subr.bf16.mxu0 0
    %1200 = vmatpush1.bf16.msra.mxu0 0
    %1201 = vmatprep.subr.bf16.mxu0 0
    %1202 = vmatpush1.bf16.msra.mxu0 0
    %1203 = vmatprep.subr.bf16.mxu0 0
    %1204 = vmatpush1.bf16.msra.mxu0 0
    %1205 = vmatprep.subr.bf16.mxu0 0
    %1206 = vmatpush1.bf16.msra.mxu0 0
    %1207 = vmatprep.subr.bf16.mxu0 0
    %1208 = vmatpush1.bf16.msra.mxu0 0
    %1209 = vmatprep.subr.bf16.mxu0 0
    %1210 = vmatpush1.bf16.msra.mxu0 0
    %1211 = vmatprep.mubr.bf16.mxu0 0
    %1212 = vmatmul.mubr.bf16.gmra.mrb[0].mxu0 %v1067
    %v1213 = vpop.f32.mrb[0].mxu0
    %v1214 = vadd.f32 0.0, %v1213
    %v1215 = vpop.f32.mrb[0].mxu0
    %v1216 = vpop.f32.mrb[0].mxu0
    %v1217 = vpop.f32.mrb[0].mxu0
    %1218 = vdwg.mxu0
    %v1219 = vadd.f32 %v167, %v1214
    %v1220 = vmul.f32 %v1219, 0.5
    %v1221 = vtanh.pop %v1220
    %v1222 = vmul.f32 %v1221, 0.5
    %v1223 = vadd.f32 %v1222, 0.5
    %v1224 = vtanh.pop %v1219
    %v1225 = vmul.f32 %v1223, %v1055
    %1227 = vrot.lane.b32.xlu0 %v1224, 64
    %v1228 = vpop.permute.xlu0 %1227
    %v1230 = vmul.f32 %v1223, %v1228
    %1232 = vrot.lane.b32.xlu0 %v1230, 32
    %v1233 = vpop.permute.xlu0 %1232
    %v1235 = vadd.f32 %v1225, %v1233
    %v1236 = vtanh.pop %v1235
    %1238 = vrot.lane.b32.xlu0 %v1236, 64
    %v1239 = vpop.permute.xlu0 %1238
    %v1241 = vmul.f32 %v1223, %v1239
    %v1242 = vpack.c.bf16 %v1241, %v1241
    %1244 = vrot.lane.b32.xlu0 %v1242, 32
    %v1245 = vpop.permute.xlu0 %1244
    %v1247 = vsel %vm211, %v1245, 0
    %1249 = vmatprep.subr.bf16.mxu0 0
    %1250 = vmatpush1.bf16.msra.mxu0 %v342
    %1251 = vmatprep.subr.bf16.mxu0 0
    %1252 = vmatpush1.bf16.msra.mxu0 %v343
    %1253 = vmatprep.subr.bf16.mxu0 0
    %1254 = vmatpush1.bf16.msra.mxu0 0
    %1255 = vmatprep.subr.bf16.mxu0 0
    %1256 = vmatpush1.bf16.msra.mxu0 0
    %1257 = vmatprep.subr.bf16.mxu0 0
    %1258 = vmatpush1.bf16.msra.mxu0 0
    %1259 = vmatprep.subr.bf16.mxu0 0
    %1260 = vmatpush1.bf16.msra.mxu0 0
    %1261 = vmatprep.subr.bf16.mxu0 0
    %1262 = vmatpush1.bf16.msra.mxu0 0
    %1263 = vmatprep.subr.bf16.mxu0 0
    %1264 = vmatpush1.bf16.msra.mxu0 0
    %1265 = vmatprep.subr.bf16.mxu0 0
    %1266 = vmatpush1.bf16.msra.mxu0 0
    %1267 = vmatprep.subr.bf16.mxu0 0
    %1268 = vmatpush1.bf16.msra.mxu0 0
    %1269 = vmatprep.subr.bf16.mxu0 0
    %1270 = vmatpush1.bf16.msra.mxu0 0
    %1271 = vmatprep.subr.bf16.mxu0 0
    %1272 = vmatpush1.bf16.msra.mxu0 0
    %1273 = vmatprep.subr.bf16.mxu0 0
    %1274 = vmatpush1.bf16.msra.mxu0 0
    %1275 = vmatprep.subr.bf16.mxu0 0
    %1276 = vmatpush1.bf16.msra.mxu0 0
    %1277 = vmatprep.subr.bf16.mxu0 0
    %1278 = vmatpush1.bf16.msra.mxu0 0
    %1279 = vmatprep.subr.bf16.mxu0 0
    %1280 = vmatpush1.bf16.msra.mxu0 0
    %1281 = vmatprep.mubr.bf16.mxu0 0
    %1282 = vmatmul.mubr.bf16.gmra.mrb[0].mxu0 %v1247
    %v1283 = vpop.f32.mrb[0].mxu0
    %v1284 = vadd.f32 0.0, %v1283
    %v1285 = vpop.f32.mrb[0].mxu0
    %v1286 = vpop.f32.mrb[0].mxu0
    %v1287 = vpop.f32.mrb[0].mxu0
    %1288 = vdwg.mxu0
    %v1289 = vadd.f32 %v1174, %v1284
    %v1290 = vmul.f32 %v1289, 0.5
    %v1291 = vtanh.pop %v1290
    %v1292 = vmul.f32 %v1291, 0.5
    %v1293 = vadd.f32 %v1292, 0.5
    %v1294 = vtanh.pop %v1289
    %v1295 = vmul.f32 %v1293, %v1125
    %1297 = vrot.lane.b32.xlu0 %v1294, 64
    %v1298 = vpop.permute.xlu0 %1297
    %v1300 = vmul.f32 %v1293, %v1298
    %1302 = vrot.lane.b32.xlu0 %v1300, 32
    %v1303 = vpop.permute.xlu0 %1302
    %v1305 = vadd.f32 %v1295, %v1303
    %v1306 = vtanh.pop %v1305
    %1308 = vrot.lane.b32.xlu0 %v1306, 64
    %v1309 = vpop.permute.xlu0 %1308
    %v1311 = vmul.f32 %v1293, %v1309
    %v1312 = vpack.c.bf16 %v1311, %v1311
    %1314 = vrot.lane.b32.xlu0 %v1312, 32
    %v1315 = vpop.permute.xlu0 %1314
    %v1317 = vsel %vm211, %v1315, 0
    %1319 = vmatprep.subr.bf16.mxu0 0
    %1320 = vmatpush1.bf16.msra.mxu0 %v207
    %1321 = vmatprep.subr.bf16.mxu0 0
    %1322 = vmatpush1.bf16.msra.mxu0 %v208
    %1323 = vmatprep.subr.bf16.mxu0 0
    %1324 = vmatpush1.bf16.msra.mxu0 0
    %1325 = vmatprep.subr.bf16.mxu0 0
    %1326 = vmatpush1.bf16.msra.mxu0 0
    %1327 = vmatprep.subr.bf16.mxu0 0
    %1328 = vmatpush1.bf16.msra.mxu0 0
    %1329 = vmatprep.subr.bf16.mxu0 0
    %1330 = vmatpush1.bf16.msra.mxu0 0
    %1331 = vmatprep.subr.bf16.mxu0 0
    %1332 = vmatpush1.bf16.msra.mxu0 0
    %1333 = vmatprep.subr.bf16.mxu0 0
    %1334 = vmatpush1.bf16.msra.mxu0 0
    %1335 = vmatprep.subr.bf16.mxu0 0
    %1336 = vmatpush1.bf16.msra.mxu0 0
    %1337 = vmatprep.subr.bf16.mxu0 0
    %1338 = vmatpush1.bf16.msra.mxu0 0
    %1339 = vmatprep.subr.bf16.mxu0 0
    %1340 = vmatpush1.bf16.msra.mxu0 0
    %1341 = vmatprep.subr.bf16.mxu0 0
    %1342 = vmatpush1.bf16.msra.mxu0 0
    %1343 = vmatprep.subr.bf16.mxu0 0
    %1344 = vmatpush1.bf16.msra.mxu0 0
    %1345 = vmatprep.subr.bf16.mxu0 0
    %1346 = vmatpush1.bf16.msra.mxu0 0
    %1347 = vmatprep.subr.bf16.mxu0 0
    %1348 = vmatpush1.bf16.msra.mxu0 0
    %1349 = vmatprep.subr.bf16.mxu0 0
    %1350 = vmatpush1.bf16.msra.mxu0 0
    %1351 = vmatprep.mubr.bf16.mxu0 0
    %1352 = vmatmul.mubr.bf16.gmra.mrb[0].mxu0 %v1317
    %v1353 = vpop.f32.mrb[0].mxu0
    %v1354 = vadd.f32 %v197, %v1353
    %v1355 = vpop.f32.mrb[0].mxu0
    %v1356 = vpop.f32.mrb[0].mxu0
    %v1357 = vpop.f32.mrb[0].mxu0
    %1358 = vdwg.mxu0
    %1359 = vmatprep.subr.bf16.mxu0 0
    %1360 = vmatpush1.bf16.msra.mxu0 %v263
    %1361 = vmatprep.subr.bf16.mxu0 0
    %1362 = vmatpush1.bf16.msra.mxu0 %v264
    %1363 = vmatprep.subr.bf16.mxu0 0
    %1364 = vmatpush1.bf16.msra.mxu0 0
    %1365 = vmatprep.subr.bf16.mxu0 0
    %1366 = vmatpush1.bf16.msra.mxu0 0
    %1367 = vmatprep.subr.bf16.mxu0 0
    %1368 = vmatpush1.bf16.msra.mxu0 0
    %1369 = vmatprep.subr.bf16.mxu0 0
    %1370 = vmatpush1.bf16.msra.mxu0 0
    %1371 = vmatprep.subr.bf16.mxu0 0
    %1372 = vmatpush1.bf16.msra.mxu0 0
    %1373 = vmatprep.subr.bf16.mxu0 0
    %1374 = vmatpush1.bf16.msra.mxu0 0
    %1375 = vmatprep.subr.bf16.mxu0 0
    %1376 = vmatpush1.bf16.msra.mxu0 0
    %1377 = vmatprep.subr.bf16.mxu0 0
    %1378 = vmatpush1.bf16.msra.mxu0 0
    %1379 = vmatprep.subr.bf16.mxu0 0
    %1380 = vmatpush1.bf16.msra.mxu0 0
    %1381 = vmatprep.subr.bf16.mxu0 0
    %1382 = vmatpush1.bf16.msra.mxu0 0
    %1383 = vmatprep.subr.bf16.mxu0 0
    %1384 = vmatpush1.bf16.msra.mxu0 0
    %1385 = vmatprep.subr.bf16.mxu0 0
    %1386 = vmatpush1.bf16.msra.mxu0 0
    %1387 = vmatprep.subr.bf16.mxu0 0
    %1388 = vmatpush1.bf16.msra.mxu0 0
    %1389 = vmatprep.subr.bf16.mxu0 0
    %1390 = vmatpush1.bf16.msra.mxu0 0
    %1391 = vmatprep.mubr.bf16.mxu0 0
    %1392 = vmatmul.mubr.bf16.gmra.mrb[0].mxu0 %v1247
    %v1393 = vpop.f32.mrb[0].mxu0
    %v1394 = vadd.f32 0.0, %v1393
    %v1395 = vpop.f32.mrb[0].mxu0
    %v1396 = vpop.f32.mrb[0].mxu0
    %v1397 = vpop.f32.mrb[0].mxu0
    %1398 = vdwg.mxu0
    %v1399 = vadd.f32 %v172, %v1394
    %v1400 = vmul.f32 %v1399, 0.5
    %v1401 = vtanh.pop %v1400
    %v1402 = vmul.f32 %v1401, 0.5
    %v1403 = vadd.f32 %v1402, 0.5
    %v1404 = vtanh.pop %v1399
    %v1405 = vmul.f32 %v1403, %v1235
    %1407 = vrot.lane.b32.xlu0 %v1404, 64
    %v1408 = vpop.permute.xlu0 %1407
    %v1410 = vmul.f32 %v1403, %v1408
    %1412 = vrot.lane.b32.xlu0 %v1410, 32
    %v1413 = vpop.permute.xlu0 %1412
    %v1415 = vadd.f32 %v1405, %v1413
    %v1416 = vtanh.pop %v1415
    %1418 = vrot.lane.b32.xlu0 %v1416, 64
    %v1419 = vpop.permute.xlu0 %1418
    %v1421 = vmul.f32 %v1403, %v1419
    %v1422 = vpack.c.bf16 %v1421, %v1421
    %1424 = vrot.lane.b32.xlu0 %v1422, 32
    %v1425 = vpop.permute.xlu0 %1424
    %v1427 = vsel %vm211, %v1425, 0
    %1429 = vmatprep.subr.bf16.mxu0 0
    %1430 = vmatpush1.bf16.msra.mxu0 %v342
    %1431 = vmatprep.subr.bf16.mxu0 0
    %1432 = vmatpush1.bf16.msra.mxu0 %v343
    %1433 = vmatprep.subr.bf16.mxu0 0
    %1434 = vmatpush1.bf16.msra.mxu0 0
    %1435 = vmatprep.subr.bf16.mxu0 0
    %1436 = vmatpush1.bf16.msra.mxu0 0
    %1437 = vmatprep.subr.bf16.mxu0 0
    %1438 = vmatpush1.bf16.msra.mxu0 0
    %1439 = vmatprep.subr.bf16.mxu0 0
    %1440 = vmatpush1.bf16.msra.mxu0 0
    %1441 = vmatprep.subr.bf16.mxu0 0
    %1442 = vmatpush1.bf16.msra.mxu0 0
    %1443 = vmatprep.subr.bf16.mxu0 0
    %1444 = vmatpush1.bf16.msra.mxu0 0
    %1445 = vmatprep.subr.bf16.mxu0 0
    %1446 = vmatpush1.bf16.msra.mxu0 0
    %1447 = vmatprep.subr.bf16.mxu0 0
    %1448 = vmatpush1.bf16.msra.mxu0 0
    %1449 = vmatprep.subr.bf16.mxu0 0
    %1450 = vmatpush1.bf16.msra.mxu0 0
    %1451 = vmatprep.subr.bf16.mxu0 0
    %1452 = vmatpush1.bf16.msra.mxu0 0
    %1453 = vmatprep.subr.bf16.mxu0 0
    %1454 = vmatpush1.bf16.msra.mxu0 0
    %1455 = vmatprep.subr.bf16.mxu0 0
    %1456 = vmatpush1.bf16.msra.mxu0 0
    %1457 = vmatprep.subr.bf16.mxu0 0
    %1458 = vmatpush1.bf16.msra.mxu0 0
    %1459 = vmatprep.subr.bf16.mxu0 0
    %1460 = vmatpush1.bf16.msra.mxu0 0
    %1461 = vmatprep.mubr.bf16.mxu0 0
    %1462 = vmatmul.mubr.bf16.gmra.mrb[0].mxu0 %v1427
    %v1463 = vpop.f32.mrb[0].mxu0
    %v1464 = vadd.f32 0.0, %v1463
    %v1465 = vpop.f32.mrb[0].mxu0
    %v1466 = vpop.f32.mrb[0].mxu0
    %v1467 = vpop.f32.mrb[0].mxu0
    %1468 = vdwg.mxu0
    %v1469 = vadd.f32 %v1354, %v1464
    %v1470 = vmul.f32 %v1469, 0.5
    %v1471 = vtanh.pop %v1470
    %v1472 = vmul.f32 %v1471, 0.5
    %v1473 = vadd.f32 %v1472, 0.5
    %v1474 = vtanh.pop %v1469
    %v1475 = vmul.f32 %v1473, %v1305
    %1477 = vrot.lane.b32.xlu0 %v1474, 64
    %v1478 = vpop.permute.xlu0 %1477
    %v1480 = vmul.f32 %v1473, %v1478
    %1482 = vrot.lane.b32.xlu0 %v1480, 32
    %v1483 = vpop.permute.xlu0 %1482
    %v1485 = vadd.f32 %v1475, %v1483
    %v1486 = vtanh.pop %v1485
    %1488 = vrot.lane.b32.xlu0 %v1486, 64
    %v1489 = vpop.permute.xlu0 %1488
    %v1491 = vmul.f32 %v1473, %v1489
    %v1492 = vpack.c.bf16 %v1491, %v1491
    %1494 = vrot.lane.b32.xlu0 %v1492, 32
    %v1495 = vpop.permute.xlu0 %1494
    %v1497 = vsel %vm211, %v1495, 0
    %1499 = vmatprep.subr.bf16.mxu0 0
    %1500 = vmatpush1.bf16.msra.mxu0 %v207
    %1501 = vmatprep.subr.bf16.mxu0 0
    %1502 = vmatpush1.bf16.msra.mxu0 %v208
    %1503 = vmatprep.subr.bf16.mxu0 0
    %1504 = vmatpush1.bf16.msra.mxu0 0
    %1505 = vmatprep.subr.bf16.mxu0 0
    %1506 = vmatpush1.bf16.msra.mxu0 0
    %1507 = vmatprep.subr.bf16.mxu0 0
    %1508 = vmatpush1.bf16.msra.mxu0 0
    %1509 = vmatprep.subr.bf16.mxu0 0
    %1510 = vmatpush1.bf16.msra.mxu0 0
    %1511 = vmatprep.subr.bf16.mxu0 0
    %1512 = vmatpush1.bf16.msra.mxu0 0
    %1513 = vmatprep.subr.bf16.mxu0 0
    %1514 = vmatpush1.bf16.msra.mxu0 0
    %1515 = vmatprep.subr.bf16.mxu0 0
    %1516 = vmatpush1.bf16.msra.mxu0 0
    %1517 = vmatprep.subr.bf16.mxu0 0
    %1518 = vmatpush1.bf16.msra.mxu0 0
    %1519 = vmatprep.subr.bf16.mxu0 0
    %1520 = vmatpush1.bf16.msra.mxu0 0
    %1521 = vmatprep.subr.bf16.mxu0 0
    %1522 = vmatpush1.bf16.msra.mxu0 0
    %1523 = vmatprep.subr.bf16.mxu0 0
    %1524 = vmatpush1.bf16.msra.mxu0 0
    %1525 = vmatprep.subr.bf16.mxu0 0
    %1526 = vmatpush1.bf16.msra.mxu0 0
    %1527 = vmatprep.subr.bf16.mxu0 0
    %1528 = vmatpush1.bf16.msra.mxu0 0
    %1529 = vmatprep.subr.bf16.mxu0 0
    %1530 = vmatpush1.bf16.msra.mxu0 0
    %1531 = vmatprep.mubr.bf16.mxu0 0
    %1532 = vmatmul.mubr.bf16.gmra.mrb[0].mxu0 %v1497
    %v1533 = vpop.f32.mrb[0].mxu0
    %v1534 = vadd.f32 %v197, %v1533
    %v1535 = vpop.f32.mrb[0].mxu0
    %v1536 = vpop.f32.mrb[0].mxu0
    %v1537 = vpop.f32.mrb[0].mxu0
    %1538 = vdwg.mxu0
    %1539 = vmatprep.subr.bf16.mxu0 0
    %1540 = vmatpush1.bf16.msra.mxu0 %v263
    %1541 = vmatprep.subr.bf16.mxu0 0
    %1542 = vmatpush1.bf16.msra.mxu0 %v264
    %1543 = vmatprep.subr.bf16.mxu0 0
    %1544 = vmatpush1.bf16.msra.mxu0 0
    %1545 = vmatprep.subr.bf16.mxu0 0
    %1546 = vmatpush1.bf16.msra.mxu0 0
    %1547 = vmatprep.subr.bf16.mxu0 0
    %1548 = vmatpush1.bf16.msra.mxu0 0
    %1549 = vmatprep.subr.bf16.mxu0 0
    %1550 = vmatpush1.bf16.msra.mxu0 0
    %1551 = vmatprep.subr.bf16.mxu0 0
    %1552 = vmatpush1.bf16.msra.mxu0 0
    %1553 = vmatprep.subr.bf16.mxu0 0
    %1554 = vmatpush1.bf16.msra.mxu0 0
    %1555 = vmatprep.subr.bf16.mxu0 0
    %1556 = vmatpush1.bf16.msra.mxu0 0
    %1557 = vmatprep.subr.bf16.mxu0 0
    %1558 = vmatpush1.bf16.msra.mxu0 0
    %1559 = vmatprep.subr.bf16.mxu0 0
    %1560 = vmatpush1.bf16.msra.mxu0 0
    %1561 = vmatprep.subr.bf16.mxu0 0
    %1562 = vmatpush1.bf16.msra.mxu0 0
    %1563 = vmatprep.subr.bf16.mxu0 0
    %1564 = vmatpush1.bf16.msra.mxu0 0
    %1565 = vmatprep.subr.bf16.mxu0 0
    %1566 = vmatpush1.bf16.msra.mxu0 0
    %1567 = vmatprep.subr.bf16.mxu0 0
    %1568 = vmatpush1.bf16.msra.mxu0 0
    %1569 = vmatprep.subr.bf16.mxu0 0
    %1570 = vmatpush1.bf16.msra.mxu0 0
    %1571 = vmatprep.mubr.bf16.mxu0 0
    %1572 = vmatmul.mubr.bf16.gmra.mrb[0].mxu0 %v1427
    %v1573 = vpop.f32.mrb[0].mxu0
    %v1574 = vadd.f32 0.0, %v1573
    %v1575 = vpop.f32.mrb[0].mxu0
    %v1576 = vpop.f32.mrb[0].mxu0
    %v1577 = vpop.f32.mrb[0].mxu0
    %1578 = vdwg.mxu0
    %v1579 = vadd.f32 %v177, %v1574
    %v1580 = vmul.f32 %v1579, 0.5
    %v1581 = vtanh.pop %v1580
    %v1582 = vmul.f32 %v1581, 0.5
    %v1583 = vadd.f32 %v1582, 0.5
    %v1584 = vtanh.pop %v1579
    %v1585 = vmul.f32 %v1583, %v1415
    %1587 = vrot.lane.b32.xlu0 %v1584, 64
    %v1588 = vpop.permute.xlu0 %1587
    %v1590 = vmul.f32 %v1583, %v1588
    %1592 = vrot.lane.b32.xlu0 %v1590, 32
    %v1593 = vpop.permute.xlu0 %1592
    %v1595 = vadd.f32 %v1585, %v1593
    %v1596 = vtanh.pop %v1595
    %1598 = vrot.lane.b32.xlu0 %v1596, 64
    %v1599 = vpop.permute.xlu0 %1598
    %v1601 = vmul.f32 %v1583, %v1599
    %v1602 = vpack.c.bf16 %v1601, %v1601
    %1604 = vrot.lane.b32.xlu0 %v1602, 32
    %v1605 = vpop.permute.xlu0 %1604
    %v1607 = vsel %vm211, %v1605, 0
    %1609 = vmatprep.subr.bf16.mxu0 0
    %1610 = vmatpush1.bf16.msra.mxu0 %v342
    %1611 = vmatprep.subr.bf16.mxu0 0
    %1612 = vmatpush1.bf16.msra.mxu0 %v343
    %1613 = vmatprep.subr.bf16.mxu0 0
    %1614 = vmatpush1.bf16.msra.mxu0 0
    %1615 = vmatprep.subr.bf16.mxu0 0
    %1616 = vmatpush1.bf16.msra.mxu0 0
    %1617 = vmatprep.subr.bf16.mxu0 0
    %1618 = vmatpush1.bf16.msra.mxu0 0
    %1619 = vmatprep.subr.bf16.mxu0 0
    %1620 = vmatpush1.bf16.msra.mxu0 0
    %1621 = vmatprep.subr.bf16.mxu0 0
    %1622 = vmatpush1.bf16.msra.mxu0 0
    %1623 = vmatprep.subr.bf16.mxu0 0
    %1624 = vmatpush1.bf16.msra.mxu0 0
    %1625 = vmatprep.subr.bf16.mxu0 0
    %1626 = vmatpush1.bf16.msra.mxu0 0
    %1627 = vmatprep.subr.bf16.mxu0 0
    %1628 = vmatpush1.bf16.msra.mxu0 0
    %1629 = vmatprep.subr.bf16.mxu0 0
    %1630 = vmatpush1.bf16.msra.mxu0 0
    %1631 = vmatprep.subr.bf16.mxu0 0
    %1632 = vmatpush1.bf16.msra.mxu0 0
    %1633 = vmatprep.subr.bf16.mxu0 0
    %1634 = vmatpush1.bf16.msra.mxu0 0
    %1635 = vmatprep.subr.bf16.mxu0 0
    %1636 = vmatpush1.bf16.msra.mxu0 0
    %1637 = vmatprep.subr.bf16.mxu0 0
    %1638 = vmatpush1.bf16.msra.mxu0 0
    %1639 = vmatprep.subr.bf16.mxu0 0
    %1640 = vmatpush1.bf16.msra.mxu0 0
    %1641 = vmatprep.mubr.bf16.mxu0 0
    %1642 = vmatmul.mubr.bf16.gmra.mrb[0].mxu0 %v1607
    %v1643 = vpop.f32.mrb[0].mxu0
    %v1644 = vadd.f32 0.0, %v1643
    %v1645 = vpop.f32.mrb[0].mxu0
    %v1646 = vpop.f32.mrb[0].mxu0
    %v1647 = vpop.f32.mrb[0].mxu0
    %1648 = vdwg.mxu0
    %v1649 = vadd.f32 %v1534, %v1644
    %v1650 = vmul.f32 %v1649, 0.5
    %v1651 = vtanh.pop %v1650
    %v1652 = vmul.f32 %v1651, 0.5
    %v1653 = vadd.f32 %v1652, 0.5
    %v1654 = vtanh.pop %v1649
    %v1655 = vmul.f32 %v1653, %v1485
    %1657 = vrot.lane.b32.xlu0 %v1654, 64
    %v1658 = vpop.permute.xlu0 %1657
    %v1660 = vmul.f32 %v1653, %v1658
    %1662 = vrot.lane.b32.xlu0 %v1660, 32
    %v1663 = vpop.permute.xlu0 %1662
    %v1665 = vadd.f32 %v1655, %v1663
    %v1666 = vtanh.pop %v1665
    %1668 = vrot.lane.b32.xlu0 %v1666, 64
    %v1669 = vpop.permute.xlu0 %1668
    %v1671 = vmul.f32 %v1653, %v1669
    %v1672 = vld [vmem:[%s7] sm:$0xff]
    %v1673 = vld [vmem:[%s7 + $0x8] sm:$0xff]
    %v1674 = vld [vmem:[%s7 + $0x10] sm:$0xff]
    %v1675 = vld [vmem:[%s7 + $0x18] sm:$0xff]
    %v1676 = vld [vmem:[%s8] sm:$0x1]
    %v1678 = vlaneseq
    %v1679 = vshrl.u32 %v1678, 7
    %v1680 = vsub.s32 0, %v1679
    %v1681 = vrot.slane %v1676, %v1680
    %1684 = vrot.lane.b32.xlu0 %v1671, 32
    %v1685 = vpop.permute.xlu0 %1684
    %v1686 = vsel %vm211, %v1685, 0
    %1688 = vmatprep.subr.mxu0 0.0
    %1689 = vmatpush1.msra.mxu0 %v1672
    %1690 = vmatprep.subr.mxu0 0.0
    %1691 = vmatpush1.msra.mxu0 %v1673
    %1692 = vmatprep.subr.mxu0 0.0
    %1693 = vmatpush1.msra.mxu0 %v1674
    %1694 = vmatprep.subr.mxu0 0.0
    %1695 = vmatpush1.msra.mxu0 %v1675
    %1696 = vmatprep.subr.mxu0 0.0
    %1697 = vmatpush1.msra.mxu0 0.0
    %1698 = vmatprep.subr.mxu0 0.0
    %1699 = vmatpush1.msra.mxu0 0.0
    %1700 = vmatprep.subr.mxu0 0.0
    %1701 = vmatpush1.msra.mxu0 0.0
    %1702 = vmatprep.subr.mxu0 0.0
    %1703 = vmatpush1.msra.mxu0 0.0
    %1704 = vmatprep.subr.mxu0 0.0
    %1705 = vmatpush1.msra.mxu0 0.0
    %1706 = vmatprep.subr.mxu0 0.0
    %1707 = vmatpush1.msra.mxu0 0.0
    %1708 = vmatprep.subr.mxu0 0.0
    %1709 = vmatpush1.msra.mxu0 0.0
    %1710 = vmatprep.subr.mxu0 0.0
    %1711 = vmatpush1.msra.mxu0 0.0
    %1712 = vmatprep.subr.mxu0 0.0
    %1713 = vmatpush1.msra.mxu0 0.0
    %1714 = vmatprep.subr.mxu0 0.0
    %1715 = vmatpush1.msra.mxu0 0.0
    %1716 = vmatprep.subr.mxu0 0.0
    %1717 = vmatpush1.msra.mxu0 0.0
    %1718 = vmatprep.subr.mxu0 0.0
    %1719 = vmatpush1.msra.mxu0 0.0
    %1720 = vmatprep.subr.mxu0 0.0
    %1721 = vmatpush1.msra.mxu0 0.0
    %1722 = vmatprep.subr.mxu0 0.0
    %1723 = vmatpush1.msra.mxu0 0.0
    %1724 = vmatprep.subr.mxu0 0.0
    %1725 = vmatpush1.msra.mxu0 0.0
    %1726 = vmatprep.subr.mxu0 0.0
    %1727 = vmatpush1.msra.mxu0 0.0
    %1728 = vmatprep.subr.mxu0 0.0
    %1729 = vmatpush1.msra.mxu0 0.0
    %1730 = vmatprep.subr.mxu0 0.0
    %1731 = vmatpush1.msra.mxu0 0.0
    %1732 = vmatprep.subr.mxu0 0.0
    %1733 = vmatpush1.msra.mxu0 0.0
    %1734 = vmatprep.subr.mxu0 0.0
    %1735 = vmatpush1.msra.mxu0 0.0
    %1736 = vmatprep.subr.mxu0 0.0
    %1737 = vmatpush1.msra.mxu0 0.0
    %1738 = vmatprep.subr.mxu0 0.0
    %1739 = vmatpush1.msra.mxu0 0.0
    %1740 = vmatprep.subr.mxu0 0.0
    %1741 = vmatpush1.msra.mxu0 0.0
    %1742 = vmatprep.subr.mxu0 0.0
    %1743 = vmatpush1.msra.mxu0 0.0
    %1744 = vmatprep.subr.mxu0 0.0
    %1745 = vmatpush1.msra.mxu0 0.0
    %1746 = vmatprep.subr.mxu0 0.0
    %1747 = vmatpush1.msra.mxu0 0.0
    %1748 = vmatprep.subr.mxu0 0.0
    %1749 = vmatpush1.msra.mxu0 0.0
    %1750 = vmatprep.subr.mxu0 0.0
    %1751 = vmatpush1.msra.mxu0 0.0
    %1752 = vmatprep.mubr.f32.mxu0 0.0
    %1753 = vmatmul.mubr.f32.gmra.mrb[0].mxu0 %v1686
    %v1754 = vpop.f32.mrb[0].mxu0
    %v1755 = vadd.f32 %v1681, %v1754
    %v1756 = vpop.f32.mrb[0].mxu0
    %1757 = vdwg.mxu0
    %1758 = vst.msk [vmem:[#allocation2] sm:$0xff] %vm50, %v1755
    // Predicated region
    $region38: #{tpu_custom_call.1} parent=1 // pred_check
      _
    $region39: #{tpu_custom_call.1} parent=1 // pred_check_branch
      %1760 = sbr.rel (0) target = $region41
    $region40: #{tpu_custom_call.1} parent=1 // pred_region
      %s1762 = ssub.s32 128, 128
      %1763 = vsyncadd [#allocation3], %s1762
      %s1765 = sshll.u32 [#allocation2], 4
      %s1766 = int_to_ptr.vmem [resolvable:$true] %s1765
      %1768 = dma.vmem_to_hbm [thread:$0]  %s1766, 128, %s9, [#allocation3]
    $region41: #{tpu_custom_call.1} parent=1 // pred_fallthru
      _
    // Predicated region
    $region42: #{tpu_custom_call.1} parent=1 // pred_check
      _
    $region43: #{tpu_custom_call.1} parent=1 // pred_check_branch
      %1770 = sbr.rel (0) target = $region45
    $region44: #{tpu_custom_call.1} parent=1 // pred_region
      %1771 = dma.done [#allocation3], 128
    $region45: #{tpu_custom_call.1} parent=1 // pred_fallthru
      _
    %1772 = vsyncpa [#allocation3], 1

</llo_original>
